<compile_context>
chip_gen: v6e
topology: v6e:2x2x1
jax: 0.10.0
libtpu: 0.0.40
codegen_flags: <defaults>
</compile_context>

<pallas_src>
import jax
import jax.numpy as jnp
from jax.experimental import pallas as pl
from jax.experimental.pallas import tpu as pltpu

# ----- small, module-consistent shapes -----
T = 8          # sequence length
B = 4          # logical batch size (module interface)
B_P = 8        # padded batch inside the kernel (one full sublane group)
VOCAB = 50     # vocab_size
VOCAB_P = 128  # vocab padded to a full lane group for the one-hot matmul
E = 32         # args.embedding_size
H = 32         # args.rnn_size
L = 2          # args.rnn_layers


def basic_rnn_kernel(tok_ref, emb_ref, wih0_ref, whh0_ref, wihr_ref, whhr_ref,
                     h0_ref, c0_ref, dw_ref, db_ref,
                     dec_ref, hT_ref, cT_ref):
    # ---- Fused embedding lookup: one-hot (T*B_P, VOCAB_P) @ (VOCAB_P, E) on the MXU ----
    tok = tok_ref[...]                                                   # (TB, 1) int32
    vocab_ids = jax.lax.broadcasted_iota(jnp.int32, (T * B_P, VOCAB_P), 1)
    onehot = (tok == vocab_ids).astype(jnp.bfloat16)                     # (TB, VOCAB_P)
    emb = jnp.dot(onehot, emb_ref[...],
                  preferred_element_type=jnp.float32)                    # (TB, E) f32

    # ---- Hoisted layer-0 input projection: one big MXU pass, kept in registers ----
    # (TB, 4H) f32 = 8 vregs; statically sliced per step below (no VMEM staging).
    x0g = jnp.dot(emb.astype(jnp.bfloat16), wih0_ref[...],
                  preferred_element_type=jnp.float32)                    # (TB, 4H)

    # ---- Recurrent state lives in registers (Python-carried values) ----
    h = [h0_ref[l] for l in range(L)]            # each (B_P, H) f32
    c = [c0_ref[l] for l in range(L)]
    acc = jnp.zeros((B_P, H), jnp.float32)       # mean-over-time accumulator

    whh0 = whh0_ref[...]                                  # (H, 4H) bf16
    wihr = [wihr_ref[l] for l in range(L - 1)]            # each (H, 4H) bf16
    whhr = [whhr_ref[l] for l in range(L - 1)]            # each (H, 4H) bf16

    for t in range(T):                  # fully unrolled: tiny static trip count
        for l in range(L):              # unrolled layer loop
            if l == 0:
                # dot first, add second: dot(h, W_hh) only depends on step t-1;
                # v7x can fold the add into the MRB accumulate.
                gates = jnp.dot(h[0].astype(jnp.bfloat16), whh0,
                                preferred_element_type=jnp.float32) \
                        + x0g[t * B_P:(t + 1) * B_P, :]                  # (B_P, 4H)
            else:
                # two independent MXU pushes; h[l]@W_hh overlaps layer l-1's compute.
                gates = (jnp.dot(x.astype(jnp.bfloat16), wihr[l - 1],
                                 preferred_element_type=jnp.float32)
                         + jnp.dot(h[l].astype(jnp.bfloat16), whhr[l - 1],
                                   preferred_element_type=jnp.float32))  # (B_P, 4H)

            # Lane-dense activations over the full gates vreg; gate slices are static.
            sig = pl.reciprocal(1.0 + jnp.exp(-gates), approx=True)      # sigmoid
            tnh = jnp.tanh(gates)
            i_g = sig[:, 0 * H:1 * H]
            f_g = sig[:, 1 * H:2 * H]
            g_g = tnh[:, 2 * H:3 * H]
            o_g = sig[:, 3 * H:4 * H]

            c_new = f_g * c[l] + i_g * g_g
            h_new = o_g * jnp.tanh(c_new)
            c[l] = c_new
            h[l] = h_new
            x = h_new
        acc = acc + x                    # top-layer output, 'mean' aggregation

    # ---- Epilogue: mean -> decoder -> softmax (one-time work, kept in f32) ----
    mean = acc * (1.0 / T)                                               # (B_P, H)
    logits = (jnp.dot(mean, dw_ref[...], preferred_element_type=jnp.float32)
              + db_ref[...])                                             # (B_P, 2)
    z = logits - jnp.max(logits, axis=-1, keepdims=True)                 # nn.Softmax(dim=1)
    e = jnp.exp(z)
    dec_ref[...] = e / jnp.sum(e, axis=-1, keepdims=True)

    # Final-state writeback happens exactly once.
    for l in range(L):
        hT_ref[l] = h[l]
        cT_ref[l] = c[l]


_VMEM_SPEC = pl.BlockSpec(memory_space=pltpu.MemorySpace.VMEM)


@jax.jit
def basic_rnn_forward(tokens, params, hidden):
    """Mirrors BasicRNN.forward: returns (decoded, (h_n, c_n))."""
    emb_table, w_ih0, w_hh0, w_ih_r, w_hh_r, dec_w, dec_b = params
    h0, c0 = hidden
    bsz = tokens.shape[1]
    pad = B_P - bsz

    # Batch padding to one full sublane group; pad rows are sliced off on return.
    tok_p = jnp.pad(tokens.astype(jnp.int32), ((0, 0), (0, pad)))        # pad token = 0
    tok_flat = tok_p.reshape(T * B_P, 1)
    h0_p = jnp.pad(h0, ((0, 0), (0, pad), (0, 0)))
    c0_p = jnp.pad(c0, ((0, 0), (0, pad), (0, 0)))

    out_shape = (
        jax.ShapeDtypeStruct((B_P, 2), jnp.float32),      # decoded (padded)
        jax.ShapeDtypeStruct((L, B_P, H), jnp.float32),   # h_n (padded)
        jax.ShapeDtypeStruct((L, B_P, H), jnp.float32),   # c_n (padded)
    )
    decoded, h_n, c_n = pl.pallas_call(
        basic_rnn_kernel,
        out_shape=out_shape,
        in_specs=[_VMEM_SPEC] * 10,
        out_specs=(_VMEM_SPEC, _VMEM_SPEC, _VMEM_SPEC),
        # NOTE: grid-less call — total resident data < 100 KiB, far under scoped VMEM
        # on v5e/v6e/v7x.  If T/B/H grow, reintroduce a trailing "arbitrary" grid axis
        # and stream the embeddings.
        # TODO(synk): on v7x, shard a larger batch over the 2 TensorCores with a
        # leading "parallel" grid axis; not worthwhile at B=4.
    )(tok_flat, emb_table, w_ih0, w_hh0, w_ih_r, w_hh_r, h0_p, c0_p, dec_w, dec_b)

    return decoded[:bsz], (h_n[:, :bsz], c_n[:, :bsz])


def init_params(key):
    """Deterministic init matching BasicRNN.init_weights / PyTorch LSTM defaults.

    LSTM weights are stored pre-transposed to (in_features, 4*H), gate order
    [i, f, g, o], and pre-cast to bf16 (MXU operand dtype).  Embedding table is
    zero-padded to VOCAB_P rows for the in-kernel one-hot matmul.
    """
    initrange = 0.1
    stdv = 1.0 / jnp.sqrt(float(H))
    k = jax.random.split(key, 6)
    emb_table = jax.random.uniform(k[0], (VOCAB, E), jnp.float32, -initrange, initrange)
    emb_table_p = (jnp.zeros((VOCAB_P, E), jnp.float32)
                   .at[:VOCAB].set(emb_table).astype(jnp.bfloat16))
    w_ih0  = jax.random.uniform(k[1], (E, 4 * H), jnp.float32, -stdv, stdv).astype(jnp.bfloat16)
    w_hh0  = jax.random.uniform(k[2], (H, 4 * H), jnp.float32, -stdv, stdv).astype(jnp.bfloat16)
    w_ih_r = jax.random.uniform(k[3], (L - 1, H, 4 * H), jnp.float32, -stdv, stdv).astype(jnp.bfloat16)
    w_hh_r = jax.random.uniform(k[4], (L - 1, H, 4 * H), jnp.float32, -stdv, stdv).astype(jnp.bfloat16)
    dec_w  = jax.random.uniform(k[5], (H, 2), jnp.float32, -initrange, initrange)
    dec_b  = jnp.zeros((1, 2), jnp.float32)   # decoder.bias.data.fill_(0)
    return emb_table_p, w_ih0, w_hh0, w_ih_r, w_hh_r, dec_w, dec_b


def init_hidden(bsz):
    return (jnp.zeros((L, bsz, H), jnp.float32),
            jnp.zeros((L, bsz, H), jnp.float32))


if __name__ == "__main__":
    key = jax.random.PRNGKey(0)
    pkey, tkey = jax.random.split(key)
    params = init_params(pkey)
    tokens = jax.random.randint(tkey, (T, B), 0, VOCAB, dtype=jnp.int32)
    hidden = init_hidden(B)

    decoded, (h_n, c_n) = basic_rnn_forward(tokens, params, hidden)
    jax.block_until_ready((decoded, h_n, c_n))

    assert decoded.shape == (B, 2)
    assert h_n.shape == (L, B, H) and c_n.shape == (L, B, H)
    assert bool(jnp.all(jnp.isfinite(decoded)))
    assert bool(jnp.allclose(jnp.sum(decoded, axis=-1), 1.0, atol=1e-3))
    print("KERNEL_OK")
</pallas_src>

<mosaic_0001>
module attributes {stable_mosaic.version = 11 : i64} {
  func.func @basic_rnn_kernel(%arg0: memref<64x1xi32, #tpu.memory_space<vmem>>, %arg1: memref<128x32xbf16, #tpu.memory_space<vmem>>, %arg2: memref<32x128xbf16, #tpu.memory_space<vmem>>, %arg3: memref<32x128xbf16, #tpu.memory_space<vmem>>, %arg4: memref<1x32x128xbf16, #tpu.memory_space<vmem>>, %arg5: memref<1x32x128xbf16, #tpu.memory_space<vmem>>, %arg6: memref<2x8x32xf32, #tpu.memory_space<vmem>>, %arg7: memref<2x8x32xf32, #tpu.memory_space<vmem>>, %arg8: memref<32x2xf32, #tpu.memory_space<vmem>>, %arg9: memref<1x2xf32, #tpu.memory_space<vmem>>, %arg10: memref<8x2xf32, #tpu.memory_space<vmem>>, %arg11: memref<2x8x32xf32, #tpu.memory_space<vmem>>, %arg12: memref<2x8x32xf32, #tpu.memory_space<vmem>>) attributes {dimension_semantics = [], scalar_prefetch = 0 : i64, scratch_operands = 0 : i64, tpu.core_type = #tpu.core_type<tc>} {
    %c0 = arith.constant 0 : index
    %c0_0 = arith.constant 0 : index
    %0 = vector.load %arg0[%c0, %c0_0] : memref<64x1xi32, #tpu.memory_space<vmem>>, vector<64x1xi32>
    %1 = tpu.iota {dimensions = array<i32: 1>} : vector<64x128xi32>
    %2 = vector.broadcast %0 : vector<64x1xi32> to vector<64x128xi32>
    %3 = arith.cmpi eq, %2, %1 : vector<64x128xi32>
    %4 = arith.extui %3 : vector<64x128xi1> to vector<64x128xi32>
    %5 = arith.sitofp %4 : vector<64x128xi32> to vector<64x128xf32>
    %6 = arith.truncf %5 : vector<64x128xf32> to vector<64x128xbf16>
    %c0_1 = arith.constant 0 : index
    %c0_2 = arith.constant 0 : index
    %7 = vector.load %arg1[%c0_1, %c0_2] : memref<128x32xbf16, #tpu.memory_space<vmem>>, vector<128x32xbf16>
    %cst = arith.constant dense<0.000000e+00> : vector<64x32xf32>
    %8 = tpu.matmul %6, %7, %cst {dimension_numbers = #tpu.dot_dimension_numbers<[1], [0], [0], [1], [0, 0, 1, 1], [], []>} : vector<64x128xbf16>, vector<128x32xbf16>, vector<64x32xf32> -> vector<64x32xf32>
    %9 = arith.truncf %8 : vector<64x32xf32> to vector<64x32xbf16>
    %c0_3 = arith.constant 0 : index
    %c0_4 = arith.constant 0 : index
    %10 = vector.load %arg2[%c0_3, %c0_4] : memref<32x128xbf16, #tpu.memory_space<vmem>>, vector<32x128xbf16>
    %cst_5 = arith.constant dense<0.000000e+00> : vector<64x128xf32>
    %11 = tpu.matmul %9, %10, %cst_5 {dimension_numbers = #tpu.dot_dimension_numbers<[1], [0], [0], [1], [0, 0, 1, 1], [], []>} : vector<64x32xbf16>, vector<32x128xbf16>, vector<64x128xf32> -> vector<64x128xf32>
    %c0_6 = arith.constant 0 : index
    %c0_7 = arith.constant 0 : index
    %c0_8 = arith.constant 0 : index
    %12 = vector.load %arg6[%c0_6, %c0_7, %c0_8] : memref<2x8x32xf32, #tpu.memory_space<vmem>>, vector<1x8x32xf32>
    %13 = vector.shape_cast %12 : vector<1x8x32xf32> to vector<8x32xf32>
    %c1 = arith.constant 1 : index
    %c0_9 = arith.constant 0 : index
    %c0_10 = arith.constant 0 : index
    %14 = vector.load %arg6[%c1, %c0_9, %c0_10] : memref<2x8x32xf32, #tpu.memory_space<vmem>>, vector<1x8x32xf32>
    %15 = vector.shape_cast %14 : vector<1x8x32xf32> to vector<8x32xf32>
    %c0_11 = arith.constant 0 : index
    %c0_12 = arith.constant 0 : index
    %c0_13 = arith.constant 0 : index
    %16 = vector.load %arg7[%c0_11, %c0_12, %c0_13] : memref<2x8x32xf32, #tpu.memory_space<vmem>>, vector<1x8x32xf32>
    %17 = vector.shape_cast %16 : vector<1x8x32xf32> to vector<8x32xf32>
    %c1_14 = arith.constant 1 : index
    %c0_15 = arith.constant 0 : index
    %c0_16 = arith.constant 0 : index
    %18 = vector.load %arg7[%c1_14, %c0_15, %c0_16] : memref<2x8x32xf32, #tpu.memory_space<vmem>>, vector<1x8x32xf32>
    %19 = vector.shape_cast %18 : vector<1x8x32xf32> to vector<8x32xf32>
    %cst_17 = arith.constant 0.000000e+00 : f32
    %20 = vector.broadcast %cst_17 : f32 to vector<8x32xf32>
    %c0_18 = arith.constant 0 : index
    %c0_19 = arith.constant 0 : index
    %21 = vector.load %arg3[%c0_18, %c0_19] : memref<32x128xbf16, #tpu.memory_space<vmem>>, vector<32x128xbf16>
    %c0_20 = arith.constant 0 : index
    %c0_21 = arith.constant 0 : index
    %c0_22 = arith.constant 0 : index
    %22 = vector.load %arg4[%c0_20, %c0_21, %c0_22] : memref<1x32x128xbf16, #tpu.memory_space<vmem>>, vector<1x32x128xbf16>
    %23 = vector.shape_cast %22 : vector<1x32x128xbf16> to vector<32x128xbf16>
    %c0_23 = arith.constant 0 : index
    %c0_24 = arith.constant 0 : index
    %c0_25 = arith.constant 0 : index
    %24 = vector.load %arg5[%c0_23, %c0_24, %c0_25] : memref<1x32x128xbf16, #tpu.memory_space<vmem>>, vector<1x32x128xbf16>
    %25 = vector.shape_cast %24 : vector<1x32x128xbf16> to vector<32x128xbf16>
    %26 = arith.truncf %13 : vector<8x32xf32> to vector<8x32xbf16>
    %cst_26 = arith.constant dense<0.000000e+00> : vector<8x128xf32>
    %27 = tpu.matmul %26, %21, %cst_26 {dimension_numbers = #tpu.dot_dimension_numbers<[1], [0], [0], [1], [0, 0, 1, 1], [], []>} : vector<8x32xbf16>, vector<32x128xbf16>, vector<8x128xf32> -> vector<8x128xf32>
    %28 = vector.extract_strided_slice %11 {offsets = [0, 0], sizes = [8, 128], strides = [1, 1]} : vector<64x128xf32> to vector<8x128xf32>
    %29 = arith.addf %27, %28 : vector<8x128xf32>
    %cst_27 = arith.constant 0.000000e+00 : f32
    %30 = vector.broadcast %cst_27 : f32 to vector<8x128xf32>
    %31 = arith.subf %30, %29 : vector<8x128xf32>
    %32 = math.exp %31 : vector<8x128xf32>
    %cst_28 = arith.constant 1.000000e+00 : f32
    %33 = vector.broadcast %cst_28 : f32 to vector<8x128xf32>
    %34 = arith.addf %33, %32 : vector<8x128xf32>
    %35 = tpu.reciprocal %34 {approx = true} : vector<8x128xf32> -> vector<8x128xf32>
    %36 = math.tanh %29 : vector<8x128xf32>
    %37 = vector.extract_strided_slice %35 {offsets = [0, 0], sizes = [8, 32], strides = [1, 1]} : vector<8x128xf32> to vector<8x32xf32>
    %38 = vector.extract_strided_slice %35 {offsets = [0, 32], sizes = [8, 32], strides = [1, 1]} : vector<8x128xf32> to vector<8x32xf32>
    %39 = vector.extract_strided_slice %36 {offsets = [0, 64], sizes = [8, 32], strides = [1, 1]} : vector<8x128xf32> to vector<8x32xf32>
    %40 = vector.extract_strided_slice %35 {offsets = [0, 96], sizes = [8, 32], strides = [1, 1]} : vector<8x128xf32> to vector<8x32xf32>
    %41 = arith.mulf %38, %17 : vector<8x32xf32>
    %42 = arith.mulf %37, %39 : vector<8x32xf32>
    %43 = arith.addf %41, %42 : vector<8x32xf32>
    %44 = math.tanh %43 : vector<8x32xf32>
    %45 = arith.mulf %40, %44 : vector<8x32xf32>
    %46 = arith.truncf %45 : vector<8x32xf32> to vector<8x32xbf16>
    %cst_29 = arith.constant dense<0.000000e+00> : vector<8x128xf32>
    %47 = tpu.matmul %46, %23, %cst_29 {dimension_numbers = #tpu.dot_dimension_numbers<[1], [0], [0], [1], [0, 0, 1, 1], [], []>} : vector<8x32xbf16>, vector<32x128xbf16>, vector<8x128xf32> -> vector<8x128xf32>
    %48 = arith.truncf %15 : vector<8x32xf32> to vector<8x32xbf16>
    %cst_30 = arith.constant dense<0.000000e+00> : vector<8x128xf32>
    %49 = tpu.matmul %48, %25, %cst_30 {dimension_numbers = #tpu.dot_dimension_numbers<[1], [0], [0], [1], [0, 0, 1, 1], [], []>} : vector<8x32xbf16>, vector<32x128xbf16>, vector<8x128xf32> -> vector<8x128xf32>
    %50 = arith.addf %47, %49 : vector<8x128xf32>
    %cst_31 = arith.constant 0.000000e+00 : f32
    %51 = vector.broadcast %cst_31 : f32 to vector<8x128xf32>
    %52 = arith.subf %51, %50 : vector<8x128xf32>
    %53 = math.exp %52 : vector<8x128xf32>
    %cst_32 = arith.constant 1.000000e+00 : f32
    %54 = vector.broadcast %cst_32 : f32 to vector<8x128xf32>
    %55 = arith.addf %54, %53 : vector<8x128xf32>
    %56 = tpu.reciprocal %55 {approx = true} : vector<8x128xf32> -> vector<8x128xf32>
    %57 = math.tanh %50 : vector<8x128xf32>
    %58 = vector.extract_strided_slice %56 {offsets = [0, 0], sizes = [8, 32], strides = [1, 1]} : vector<8x128xf32> to vector<8x32xf32>
    %59 = vector.extract_strided_slice %56 {offsets = [0, 32], sizes = [8, 32], strides = [1, 1]} : vector<8x128xf32> to vector<8x32xf32>
    %60 = vector.extract_strided_slice %57 {offsets = [0, 64], sizes = [8, 32], strides = [1, 1]} : vector<8x128xf32> to vector<8x32xf32>
    %61 = vector.extract_strided_slice %56 {offsets = [0, 96], sizes = [8, 32], strides = [1, 1]} : vector<8x128xf32> to vector<8x32xf32>
    %62 = arith.mulf %59, %19 : vector<8x32xf32>
    %63 = arith.mulf %58, %60 : vector<8x32xf32>
    %64 = arith.addf %62, %63 : vector<8x32xf32>
    %65 = math.tanh %64 : vector<8x32xf32>
    %66 = arith.mulf %61, %65 : vector<8x32xf32>
    %67 = arith.addf %20, %66 : vector<8x32xf32>
    %68 = arith.truncf %45 : vector<8x32xf32> to vector<8x32xbf16>
    %cst_33 = arith.constant dense<0.000000e+00> : vector<8x128xf32>
    %69 = tpu.matmul %68, %21, %cst_33 {dimension_numbers = #tpu.dot_dimension_numbers<[1], [0], [0], [1], [0, 0, 1, 1], [], []>} : vector<8x32xbf16>, vector<32x128xbf16>, vector<8x128xf32> -> vector<8x128xf32>
    %70 = vector.extract_strided_slice %11 {offsets = [8, 0], sizes = [8, 128], strides = [1, 1]} : vector<64x128xf32> to vector<8x128xf32>
    %71 = arith.addf %69, %70 : vector<8x128xf32>
    %cst_34 = arith.constant 0.000000e+00 : f32
    %72 = vector.broadcast %cst_34 : f32 to vector<8x128xf32>
    %73 = arith.subf %72, %71 : vector<8x128xf32>
    %74 = math.exp %73 : vector<8x128xf32>
    %cst_35 = arith.constant 1.000000e+00 : f32
    %75 = vector.broadcast %cst_35 : f32 to vector<8x128xf32>
    %76 = arith.addf %75, %74 : vector<8x128xf32>
    %77 = tpu.reciprocal %76 {approx = true} : vector<8x128xf32> -> vector<8x128xf32>
    %78 = math.tanh %71 : vector<8x128xf32>
    %79 = vector.extract_strided_slice %77 {offsets = [0, 0], sizes = [8, 32], strides = [1, 1]} : vector<8x128xf32> to vector<8x32xf32>
    %80 = vector.extract_strided_slice %77 {offsets = [0, 32], sizes = [8, 32], strides = [1, 1]} : vector<8x128xf32> to vector<8x32xf32>
    %81 = vector.extract_strided_slice %78 {offsets = [0, 64], sizes = [8, 32], strides = [1, 1]} : vector<8x128xf32> to vector<8x32xf32>
    %82 = vector.extract_strided_slice %77 {offsets = [0, 96], sizes = [8, 32], strides = [1, 1]} : vector<8x128xf32> to vector<8x32xf32>
    %83 = arith.mulf %80, %43 : vector<8x32xf32>
    %84 = arith.mulf %79, %81 : vector<8x32xf32>
    %85 = arith.addf %83, %84 : vector<8x32xf32>
    %86 = math.tanh %85 : vector<8x32xf32>
    %87 = arith.mulf %82, %86 : vector<8x32xf32>
    %88 = arith.truncf %87 : vector<8x32xf32> to vector<8x32xbf16>
    %cst_36 = arith.constant dense<0.000000e+00> : vector<8x128xf32>
    %89 = tpu.matmul %88, %23, %cst_36 {dimension_numbers = #tpu.dot_dimension_numbers<[1], [0], [0], [1], [0, 0, 1, 1], [], []>} : vector<8x32xbf16>, vector<32x128xbf16>, vector<8x128xf32> -> vector<8x128xf32>
    %90 = arith.truncf %66 : vector<8x32xf32> to vector<8x32xbf16>
    %cst_37 = arith.constant dense<0.000000e+00> : vector<8x128xf32>
    %91 = tpu.matmul %90, %25, %cst_37 {dimension_numbers = #tpu.dot_dimension_numbers<[1], [0], [0], [1], [0, 0, 1, 1], [], []>} : vector<8x32xbf16>, vector<32x128xbf16>, vector<8x128xf32> -> vector<8x128xf32>
    %92 = arith.addf %89, %91 : vector<8x128xf32>
    %cst_38 = arith.constant 0.000000e+00 : f32
    %93 = vector.broadcast %cst_38 : f32 to vector<8x128xf32>
    %94 = arith.subf %93, %92 : vector<8x128xf32>
    %95 = math.exp %94 : vector<8x128xf32>
    %cst_39 = arith.constant 1.000000e+00 : f32
    %96 = vector.broadcast %cst_39 : f32 to vector<8x128xf32>
    %97 = arith.addf %96, %95 : vector<8x128xf32>
    %98 = tpu.reciprocal %97 {approx = true} : vector<8x128xf32> -> vector<8x128xf32>
    %99 = math.tanh %92 : vector<8x128xf32>
    %100 = vector.extract_strided_slice %98 {offsets = [0, 0], sizes = [8, 32], strides = [1, 1]} : vector<8x128xf32> to vector<8x32xf32>
    %101 = vector.extract_strided_slice %98 {offsets = [0, 32], sizes = [8, 32], strides = [1, 1]} : vector<8x128xf32> to vector<8x32xf32>
    %102 = vector.extract_strided_slice %99 {offsets = [0, 64], sizes = [8, 32], strides = [1, 1]} : vector<8x128xf32> to vector<8x32xf32>
    %103 = vector.extract_strided_slice %98 {offsets = [0, 96], sizes = [8, 32], strides = [1, 1]} : vector<8x128xf32> to vector<8x32xf32>
    %104 = arith.mulf %101, %64 : vector<8x32xf32>
    %105 = arith.mulf %100, %102 : vector<8x32xf32>
    %106 = arith.addf %104, %105 : vector<8x32xf32>
    %107 = math.tanh %106 : vector<8x32xf32>
    %108 = arith.mulf %103, %107 : vector<8x32xf32>
    %109 = arith.addf %67, %108 : vector<8x32xf32>
    %110 = arith.truncf %87 : vector<8x32xf32> to vector<8x32xbf16>
    %cst_40 = arith.constant dense<0.000000e+00> : vector<8x128xf32>
    %111 = tpu.matmul %110, %21, %cst_40 {dimension_numbers = #tpu.dot_dimension_numbers<[1], [0], [0], [1], [0, 0, 1, 1], [], []>} : vector<8x32xbf16>, vector<32x128xbf16>, vector<8x128xf32> -> vector<8x128xf32>
    %112 = vector.extract_strided_slice %11 {offsets = [16, 0], sizes = [8, 128], strides = [1, 1]} : vector<64x128xf32> to vector<8x128xf32>
    %113 = arith.addf %111, %112 : vector<8x128xf32>
    %cst_41 = arith.constant 0.000000e+00 : f32
    %114 = vector.broadcast %cst_41 : f32 to vector<8x128xf32>
    %115 = arith.subf %114, %113 : vector<8x128xf32>
    %116 = math.exp %115 : vector<8x128xf32>
    %cst_42 = arith.constant 1.000000e+00 : f32
    %117 = vector.broadcast %cst_42 : f32 to vector<8x128xf32>
    %118 = arith.addf %117, %116 : vector<8x128xf32>
    %119 = tpu.reciprocal %118 {approx = true} : vector<8x128xf32> -> vector<8x128xf32>
    %120 = math.tanh %113 : vector<8x128xf32>
    %121 = vector.extract_strided_slice %119 {offsets = [0, 0], sizes = [8, 32], strides = [1, 1]} : vector<8x128xf32> to vector<8x32xf32>
    %122 = vector.extract_strided_slice %119 {offsets = [0, 32], sizes = [8, 32], strides = [1, 1]} : vector<8x128xf32> to vector<8x32xf32>
    %123 = vector.extract_strided_slice %120 {offsets = [0, 64], sizes = [8, 32], strides = [1, 1]} : vector<8x128xf32> to vector<8x32xf32>
    %124 = vector.extract_strided_slice %119 {offsets = [0, 96], sizes = [8, 32], strides = [1, 1]} : vector<8x128xf32> to vector<8x32xf32>
    %125 = arith.mulf %122, %85 : vector<8x32xf32>
    %126 = arith.mulf %121, %123 : vector<8x32xf32>
    %127 = arith.addf %125, %126 : vector<8x32xf32>
    %128 = math.tanh %127 : vector<8x32xf32>
    %129 = arith.mulf %124, %128 : vector<8x32xf32>
    %130 = arith.truncf %129 : vector<8x32xf32> to vector<8x32xbf16>
    %cst_43 = arith.constant dense<0.000000e+00> : vector<8x128xf32>
    %131 = tpu.matmul %130, %23, %cst_43 {dimension_numbers = #tpu.dot_dimension_numbers<[1], [0], [0], [1], [0, 0, 1, 1], [], []>} : vector<8x32xbf16>, vector<32x128xbf16>, vector<8x128xf32> -> vector<8x128xf32>
    %132 = arith.truncf %108 : vector<8x32xf32> to vector<8x32xbf16>
    %cst_44 = arith.constant dense<0.000000e+00> : vector<8x128xf32>
    %133 = tpu.matmul %132, %25, %cst_44 {dimension_numbers = #tpu.dot_dimension_numbers<[1], [0], [0], [1], [0, 0, 1, 1], [], []>} : vector<8x32xbf16>, vector<32x128xbf16>, vector<8x128xf32> -> vector<8x128xf32>
    %134 = arith.addf %131, %133 : vector<8x128xf32>
    %cst_45 = arith.constant 0.000000e+00 : f32
    %135 = vector.broadcast %cst_45 : f32 to vector<8x128xf32>
    %136 = arith.subf %135, %134 : vector<8x128xf32>
    %137 = math.exp %136 : vector<8x128xf32>
    %cst_46 = arith.constant 1.000000e+00 : f32
    %138 = vector.broadcast %cst_46 : f32 to vector<8x128xf32>
    %139 = arith.addf %138, %137 : vector<8x128xf32>
    %140 = tpu.reciprocal %139 {approx = true} : vector<8x128xf32> -> vector<8x128xf32>
    %141 = math.tanh %134 : vector<8x128xf32>
    %142 = vector.extract_strided_slice %140 {offsets = [0, 0], sizes = [8, 32], strides = [1, 1]} : vector<8x128xf32> to vector<8x32xf32>
    %143 = vector.extract_strided_slice %140 {offsets = [0, 32], sizes = [8, 32], strides = [1, 1]} : vector<8x128xf32> to vector<8x32xf32>
    %144 = vector.extract_strided_slice %141 {offsets = [0, 64], sizes = [8, 32], strides = [1, 1]} : vector<8x128xf32> to vector<8x32xf32>
    %145 = vector.extract_strided_slice %140 {offsets = [0, 96], sizes = [8, 32], strides = [1, 1]} : vector<8x128xf32> to vector<8x32xf32>
    %146 = arith.mulf %143, %106 : vector<8x32xf32>
    %147 = arith.mulf %142, %144 : vector<8x32xf32>
    %148 = arith.addf %146, %147 : vector<8x32xf32>
    %149 = math.tanh %148 : vector<8x32xf32>
    %150 = arith.mulf %145, %149 : vector<8x32xf32>
    %151 = arith.addf %109, %150 : vector<8x32xf32>
    %152 = arith.truncf %129 : vector<8x32xf32> to vector<8x32xbf16>
    %cst_47 = arith.constant dense<0.000000e+00> : vector<8x128xf32>
    %153 = tpu.matmul %152, %21, %cst_47 {dimension_numbers = #tpu.dot_dimension_numbers<[1], [0], [0], [1], [0, 0, 1, 1], [], []>} : vector<8x32xbf16>, vector<32x128xbf16>, vector<8x128xf32> -> vector<8x128xf32>
    %154 = vector.extract_strided_slice %11 {offsets = [24, 0], sizes = [8, 128], strides = [1, 1]} : vector<64x128xf32> to vector<8x128xf32>
    %155 = arith.addf %153, %154 : vector<8x128xf32>
    %cst_48 = arith.constant 0.000000e+00 : f32
    %156 = vector.broadcast %cst_48 : f32 to vector<8x128xf32>
    %157 = arith.subf %156, %155 : vector<8x128xf32>
    %158 = math.exp %157 : vector<8x128xf32>
    %cst_49 = arith.constant 1.000000e+00 : f32
    %159 = vector.broadcast %cst_49 : f32 to vector<8x128xf32>
    %160 = arith.addf %159, %158 : vector<8x128xf32>
    %161 = tpu.reciprocal %160 {approx = true} : vector<8x128xf32> -> vector<8x128xf32>
    %162 = math.tanh %155 : vector<8x128xf32>
    %163 = vector.extract_strided_slice %161 {offsets = [0, 0], sizes = [8, 32], strides = [1, 1]} : vector<8x128xf32> to vector<8x32xf32>
    %164 = vector.extract_strided_slice %161 {offsets = [0, 32], sizes = [8, 32], strides = [1, 1]} : vector<8x128xf32> to vector<8x32xf32>
    %165 = vector.extract_strided_slice %162 {offsets = [0, 64], sizes = [8, 32], strides = [1, 1]} : vector<8x128xf32> to vector<8x32xf32>
    %166 = vector.extract_strided_slice %161 {offsets = [0, 96], sizes = [8, 32], strides = [1, 1]} : vector<8x128xf32> to vector<8x32xf32>
    %167 = arith.mulf %164, %127 : vector<8x32xf32>
    %168 = arith.mulf %163, %165 : vector<8x32xf32>
    %169 = arith.addf %167, %168 : vector<8x32xf32>
    %170 = math.tanh %169 : vector<8x32xf32>
    %171 = arith.mulf %166, %170 : vector<8x32xf32>
    %172 = arith.truncf %171 : vector<8x32xf32> to vector<8x32xbf16>
    %cst_50 = arith.constant dense<0.000000e+00> : vector<8x128xf32>
    %173 = tpu.matmul %172, %23, %cst_50 {dimension_numbers = #tpu.dot_dimension_numbers<[1], [0], [0], [1], [0, 0, 1, 1], [], []>} : vector<8x32xbf16>, vector<32x128xbf16>, vector<8x128xf32> -> vector<8x128xf32>
    %174 = arith.truncf %150 : vector<8x32xf32> to vector<8x32xbf16>
    %cst_51 = arith.constant dense<0.000000e+00> : vector<8x128xf32>
    %175 = tpu.matmul %174, %25, %cst_51 {dimension_numbers = #tpu.dot_dimension_numbers<[1], [0], [0], [1], [0, 0, 1, 1], [], []>} : vector<8x32xbf16>, vector<32x128xbf16>, vector<8x128xf32> -> vector<8x128xf32>
    %176 = arith.addf %173, %175 : vector<8x128xf32>
    %cst_52 = arith.constant 0.000000e+00 : f32
    %177 = vector.broadcast %cst_52 : f32 to vector<8x128xf32>
    %178 = arith.subf %177, %176 : vector<8x128xf32>
    %179 = math.exp %178 : vector<8x128xf32>
    %cst_53 = arith.constant 1.000000e+00 : f32
    %180 = vector.broadcast %cst_53 : f32 to vector<8x128xf32>
    %181 = arith.addf %180, %179 : vector<8x128xf32>
    %182 = tpu.reciprocal %181 {approx = true} : vector<8x128xf32> -> vector<8x128xf32>
    %183 = math.tanh %176 : vector<8x128xf32>
    %184 = vector.extract_strided_slice %182 {offsets = [0, 0], sizes = [8, 32], strides = [1, 1]} : vector<8x128xf32> to vector<8x32xf32>
    %185 = vector.extract_strided_slice %182 {offsets = [0, 32], sizes = [8, 32], strides = [1, 1]} : vector<8x128xf32> to vector<8x32xf32>
    %186 = vector.extract_strided_slice %183 {offsets = [0, 64], sizes = [8, 32], strides = [1, 1]} : vector<8x128xf32> to vector<8x32xf32>
    %187 = vector.extract_strided_slice %182 {offsets = [0, 96], sizes = [8, 32], strides = [1, 1]} : vector<8x128xf32> to vector<8x32xf32>
    %188 = arith.mulf %185, %148 : vector<8x32xf32>
    %189 = arith.mulf %184, %186 : vector<8x32xf32>
    %190 = arith.addf %188, %189 : vector<8x32xf32>
    %191 = math.tanh %190 : vector<8x32xf32>
    %192 = arith.mulf %187, %191 : vector<8x32xf32>
    %193 = arith.addf %151, %192 : vector<8x32xf32>
    %194 = arith.truncf %171 : vector<8x32xf32> to vector<8x32xbf16>
    %cst_54 = arith.constant dense<0.000000e+00> : vector<8x128xf32>
    %195 = tpu.matmul %194, %21, %cst_54 {dimension_numbers = #tpu.dot_dimension_numbers<[1], [0], [0], [1], [0, 0, 1, 1], [], []>} : vector<8x32xbf16>, vector<32x128xbf16>, vector<8x128xf32> -> vector<8x128xf32>
    %196 = vector.extract_strided_slice %11 {offsets = [32, 0], sizes = [8, 128], strides = [1, 1]} : vector<64x128xf32> to vector<8x128xf32>
    %197 = arith.addf %195, %196 : vector<8x128xf32>
    %cst_55 = arith.constant 0.000000e+00 : f32
    %198 = vector.broadcast %cst_55 : f32 to vector<8x128xf32>
    %199 = arith.subf %198, %197 : vector<8x128xf32>
    %200 = math.exp %199 : vector<8x128xf32>
    %cst_56 = arith.constant 1.000000e+00 : f32
    %201 = vector.broadcast %cst_56 : f32 to vector<8x128xf32>
    %202 = arith.addf %201, %200 : vector<8x128xf32>
    %203 = tpu.reciprocal %202 {approx = true} : vector<8x128xf32> -> vector<8x128xf32>
    %204 = math.tanh %197 : vector<8x128xf32>
    %205 = vector.extract_strided_slice %203 {offsets = [0, 0], sizes = [8, 32], strides = [1, 1]} : vector<8x128xf32> to vector<8x32xf32>
    %206 = vector.extract_strided_slice %203 {offsets = [0, 32], sizes = [8, 32], strides = [1, 1]} : vector<8x128xf32> to vector<8x32xf32>
    %207 = vector.extract_strided_slice %204 {offsets = [0, 64], sizes = [8, 32], strides = [1, 1]} : vector<8x128xf32> to vector<8x32xf32>
    %208 = vector.extract_strided_slice %203 {offsets = [0, 96], sizes = [8, 32], strides = [1, 1]} : vector<8x128xf32> to vector<8x32xf32>
    %209 = arith.mulf %206, %169 : vector<8x32xf32>
    %210 = arith.mulf %205, %207 : vector<8x32xf32>
    %211 = arith.addf %209, %210 : vector<8x32xf32>
    %212 = math.tanh %211 : vector<8x32xf32>
    %213 = arith.mulf %208, %212 : vector<8x32xf32>
    %214 = arith.truncf %213 : vector<8x32xf32> to vector<8x32xbf16>
    %cst_57 = arith.constant dense<0.000000e+00> : vector<8x128xf32>
    %215 = tpu.matmul %214, %23, %cst_57 {dimension_numbers = #tpu.dot_dimension_numbers<[1], [0], [0], [1], [0, 0, 1, 1], [], []>} : vector<8x32xbf16>, vector<32x128xbf16>, vector<8x128xf32> -> vector<8x128xf32>
    %216 = arith.truncf %192 : vector<8x32xf32> to vector<8x32xbf16>
    %cst_58 = arith.constant dense<0.000000e+00> : vector<8x128xf32>
    %217 = tpu.matmul %216, %25, %cst_58 {dimension_numbers = #tpu.dot_dimension_numbers<[1], [0], [0], [1], [0, 0, 1, 1], [], []>} : vector<8x32xbf16>, vector<32x128xbf16>, vector<8x128xf32> -> vector<8x128xf32>
    %218 = arith.addf %215, %217 : vector<8x128xf32>
    %cst_59 = arith.constant 0.000000e+00 : f32
    %219 = vector.broadcast %cst_59 : f32 to vector<8x128xf32>
    %220 = arith.subf %219, %218 : vector<8x128xf32>
    %221 = math.exp %220 : vector<8x128xf32>
    %cst_60 = arith.constant 1.000000e+00 : f32
    %222 = vector.broadcast %cst_60 : f32 to vector<8x128xf32>
    %223 = arith.addf %222, %221 : vector<8x128xf32>
    %224 = tpu.reciprocal %223 {approx = true} : vector<8x128xf32> -> vector<8x128xf32>
    %225 = math.tanh %218 : vector<8x128xf32>
    %226 = vector.extract_strided_slice %224 {offsets = [0, 0], sizes = [8, 32], strides = [1, 1]} : vector<8x128xf32> to vector<8x32xf32>
    %227 = vector.extract_strided_slice %224 {offsets = [0, 32], sizes = [8, 32], strides = [1, 1]} : vector<8x128xf32> to vector<8x32xf32>
    %228 = vector.extract_strided_slice %225 {offsets = [0, 64], sizes = [8, 32], strides = [1, 1]} : vector<8x128xf32> to vector<8x32xf32>
    %229 = vector.extract_strided_slice %224 {offsets = [0, 96], sizes = [8, 32], strides = [1, 1]} : vector<8x128xf32> to vector<8x32xf32>
    %230 = arith.mulf %227, %190 : vector<8x32xf32>
    %231 = arith.mulf %226, %228 : vector<8x32xf32>
    %232 = arith.addf %230, %231 : vector<8x32xf32>
    %233 = math.tanh %232 : vector<8x32xf32>
    %234 = arith.mulf %229, %233 : vector<8x32xf32>
    %235 = arith.addf %193, %234 : vector<8x32xf32>
    %236 = arith.truncf %213 : vector<8x32xf32> to vector<8x32xbf16>
    %cst_61 = arith.constant dense<0.000000e+00> : vector<8x128xf32>
    %237 = tpu.matmul %236, %21, %cst_61 {dimension_numbers = #tpu.dot_dimension_numbers<[1], [0], [0], [1], [0, 0, 1, 1], [], []>} : vector<8x32xbf16>, vector<32x128xbf16>, vector<8x128xf32> -> vector<8x128xf32>
    %238 = vector.extract_strided_slice %11 {offsets = [40, 0], sizes = [8, 128], strides = [1, 1]} : vector<64x128xf32> to vector<8x128xf32>
    %239 = arith.addf %237, %238 : vector<8x128xf32>
    %cst_62 = arith.constant 0.000000e+00 : f32
    %240 = vector.broadcast %cst_62 : f32 to vector<8x128xf32>
    %241 = arith.subf %240, %239 : vector<8x128xf32>
    %242 = math.exp %241 : vector<8x128xf32>
    %cst_63 = arith.constant 1.000000e+00 : f32
    %243 = vector.broadcast %cst_63 : f32 to vector<8x128xf32>
    %244 = arith.addf %243, %242 : vector<8x128xf32>
    %245 = tpu.reciprocal %244 {approx = true} : vector<8x128xf32> -> vector<8x128xf32>
    %246 = math.tanh %239 : vector<8x128xf32>
    %247 = vector.extract_strided_slice %245 {offsets = [0, 0], sizes = [8, 32], strides = [1, 1]} : vector<8x128xf32> to vector<8x32xf32>
    %248 = vector.extract_strided_slice %245 {offsets = [0, 32], sizes = [8, 32], strides = [1, 1]} : vector<8x128xf32> to vector<8x32xf32>
    %249 = vector.extract_strided_slice %246 {offsets = [0, 64], sizes = [8, 32], strides = [1, 1]} : vector<8x128xf32> to vector<8x32xf32>
    %250 = vector.extract_strided_slice %245 {offsets = [0, 96], sizes = [8, 32], strides = [1, 1]} : vector<8x128xf32> to vector<8x32xf32>
    %251 = arith.mulf %248, %211 : vector<8x32xf32>
    %252 = arith.mulf %247, %249 : vector<8x32xf32>
    %253 = arith.addf %251, %252 : vector<8x32xf32>
    %254 = math.tanh %253 : vector<8x32xf32>
    %255 = arith.mulf %250, %254 : vector<8x32xf32>
    %256 = arith.truncf %255 : vector<8x32xf32> to vector<8x32xbf16>
    %cst_64 = arith.constant dense<0.000000e+00> : vector<8x128xf32>
    %257 = tpu.matmul %256, %23, %cst_64 {dimension_numbers = #tpu.dot_dimension_numbers<[1], [0], [0], [1], [0, 0, 1, 1], [], []>} : vector<8x32xbf16>, vector<32x128xbf16>, vector<8x128xf32> -> vector<8x128xf32>
    %258 = arith.truncf %234 : vector<8x32xf32> to vector<8x32xbf16>
    %cst_65 = arith.constant dense<0.000000e+00> : vector<8x128xf32>
    %259 = tpu.matmul %258, %25, %cst_65 {dimension_numbers = #tpu.dot_dimension_numbers<[1], [0], [0], [1], [0, 0, 1, 1], [], []>} : vector<8x32xbf16>, vector<32x128xbf16>, vector<8x128xf32> -> vector<8x128xf32>
    %260 = arith.addf %257, %259 : vector<8x128xf32>
    %cst_66 = arith.constant 0.000000e+00 : f32
    %261 = vector.broadcast %cst_66 : f32 to vector<8x128xf32>
    %262 = arith.subf %261, %260 : vector<8x128xf32>
    %263 = math.exp %262 : vector<8x128xf32>
    %cst_67 = arith.constant 1.000000e+00 : f32
    %264 = vector.broadcast %cst_67 : f32 to vector<8x128xf32>
    %265 = arith.addf %264, %263 : vector<8x128xf32>
    %266 = tpu.reciprocal %265 {approx = true} : vector<8x128xf32> -> vector<8x128xf32>
    %267 = math.tanh %260 : vector<8x128xf32>
    %268 = vector.extract_strided_slice %266 {offsets = [0, 0], sizes = [8, 32], strides = [1, 1]} : vector<8x128xf32> to vector<8x32xf32>
    %269 = vector.extract_strided_slice %266 {offsets = [0, 32], sizes = [8, 32], strides = [1, 1]} : vector<8x128xf32> to vector<8x32xf32>
    %270 = vector.extract_strided_slice %267 {offsets = [0, 64], sizes = [8, 32], strides = [1, 1]} : vector<8x128xf32> to vector<8x32xf32>
    %271 = vector.extract_strided_slice %266 {offsets = [0, 96], sizes = [8, 32], strides = [1, 1]} : vector<8x128xf32> to vector<8x32xf32>
    %272 = arith.mulf %269, %232 : vector<8x32xf32>
    %273 = arith.mulf %268, %270 : vector<8x32xf32>
    %274 = arith.addf %272, %273 : vector<8x32xf32>
    %275 = math.tanh %274 : vector<8x32xf32>
    %276 = arith.mulf %271, %275 : vector<8x32xf32>
    %277 = arith.addf %235, %276 : vector<8x32xf32>
    %278 = arith.truncf %255 : vector<8x32xf32> to vector<8x32xbf16>
    %cst_68 = arith.constant dense<0.000000e+00> : vector<8x128xf32>
    %279 = tpu.matmul %278, %21, %cst_68 {dimension_numbers = #tpu.dot_dimension_numbers<[1], [0], [0], [1], [0, 0, 1, 1], [], []>} : vector<8x32xbf16>, vector<32x128xbf16>, vector<8x128xf32> -> vector<8x128xf32>
    %280 = vector.extract_strided_slice %11 {offsets = [48, 0], sizes = [8, 128], strides = [1, 1]} : vector<64x128xf32> to vector<8x128xf32>
    %281 = arith.addf %279, %280 : vector<8x128xf32>
    %cst_69 = arith.constant 0.000000e+00 : f32
    %282 = vector.broadcast %cst_69 : f32 to vector<8x128xf32>
    %283 = arith.subf %282, %281 : vector<8x128xf32>
    %284 = math.exp %283 : vector<8x128xf32>
    %cst_70 = arith.constant 1.000000e+00 : f32
    %285 = vector.broadcast %cst_70 : f32 to vector<8x128xf32>
    %286 = arith.addf %285, %284 : vector<8x128xf32>
    %287 = tpu.reciprocal %286 {approx = true} : vector<8x128xf32> -> vector<8x128xf32>
    %288 = math.tanh %281 : vector<8x128xf32>
    %289 = vector.extract_strided_slice %287 {offsets = [0, 0], sizes = [8, 32], strides = [1, 1]} : vector<8x128xf32> to vector<8x32xf32>
    %290 = vector.extract_strided_slice %287 {offsets = [0, 32], sizes = [8, 32], strides = [1, 1]} : vector<8x128xf32> to vector<8x32xf32>
    %291 = vector.extract_strided_slice %288 {offsets = [0, 64], sizes = [8, 32], strides = [1, 1]} : vector<8x128xf32> to vector<8x32xf32>
    %292 = vector.extract_strided_slice %287 {offsets = [0, 96], sizes = [8, 32], strides = [1, 1]} : vector<8x128xf32> to vector<8x32xf32>
    %293 = arith.mulf %290, %253 : vector<8x32xf32>
    %294 = arith.mulf %289, %291 : vector<8x32xf32>
    %295 = arith.addf %293, %294 : vector<8x32xf32>
    %296 = math.tanh %295 : vector<8x32xf32>
    %297 = arith.mulf %292, %296 : vector<8x32xf32>
    %298 = arith.truncf %297 : vector<8x32xf32> to vector<8x32xbf16>
    %cst_71 = arith.constant dense<0.000000e+00> : vector<8x128xf32>
    %299 = tpu.matmul %298, %23, %cst_71 {dimension_numbers = #tpu.dot_dimension_numbers<[1], [0], [0], [1], [0, 0, 1, 1], [], []>} : vector<8x32xbf16>, vector<32x128xbf16>, vector<8x128xf32> -> vector<8x128xf32>
    %300 = arith.truncf %276 : vector<8x32xf32> to vector<8x32xbf16>
    %cst_72 = arith.constant dense<0.000000e+00> : vector<8x128xf32>
    %301 = tpu.matmul %300, %25, %cst_72 {dimension_numbers = #tpu.dot_dimension_numbers<[1], [0], [0], [1], [0, 0, 1, 1], [], []>} : vector<8x32xbf16>, vector<32x128xbf16>, vector<8x128xf32> -> vector<8x128xf32>
    %302 = arith.addf %299, %301 : vector<8x128xf32>
    %cst_73 = arith.constant 0.000000e+00 : f32
    %303 = vector.broadcast %cst_73 : f32 to vector<8x128xf32>
    %304 = arith.subf %303, %302 : vector<8x128xf32>
    %305 = math.exp %304 : vector<8x128xf32>
    %cst_74 = arith.constant 1.000000e+00 : f32
    %306 = vector.broadcast %cst_74 : f32 to vector<8x128xf32>
    %307 = arith.addf %306, %305 : vector<8x128xf32>
    %308 = tpu.reciprocal %307 {approx = true} : vector<8x128xf32> -> vector<8x128xf32>
    %309 = math.tanh %302 : vector<8x128xf32>
    %310 = vector.extract_strided_slice %308 {offsets = [0, 0], sizes = [8, 32], strides = [1, 1]} : vector<8x128xf32> to vector<8x32xf32>
    %311 = vector.extract_strided_slice %308 {offsets = [0, 32], sizes = [8, 32], strides = [1, 1]} : vector<8x128xf32> to vector<8x32xf32>
    %312 = vector.extract_strided_slice %309 {offsets = [0, 64], sizes = [8, 32], strides = [1, 1]} : vector<8x128xf32> to vector<8x32xf32>
    %313 = vector.extract_strided_slice %308 {offsets = [0, 96], sizes = [8, 32], strides = [1, 1]} : vector<8x128xf32> to vector<8x32xf32>
    %314 = arith.mulf %311, %274 : vector<8x32xf32>
    %315 = arith.mulf %310, %312 : vector<8x32xf32>
    %316 = arith.addf %314, %315 : vector<8x32xf32>
    %317 = math.tanh %316 : vector<8x32xf32>
    %318 = arith.mulf %313, %317 : vector<8x32xf32>
    %319 = arith.addf %277, %318 : vector<8x32xf32>
    %320 = arith.truncf %297 : vector<8x32xf32> to vector<8x32xbf16>
    %cst_75 = arith.constant dense<0.000000e+00> : vector<8x128xf32>
    %321 = tpu.matmul %320, %21, %cst_75 {dimension_numbers = #tpu.dot_dimension_numbers<[1], [0], [0], [1], [0, 0, 1, 1], [], []>} : vector<8x32xbf16>, vector<32x128xbf16>, vector<8x128xf32> -> vector<8x128xf32>
    %322 = vector.extract_strided_slice %11 {offsets = [56, 0], sizes = [8, 128], strides = [1, 1]} : vector<64x128xf32> to vector<8x128xf32>
    %323 = arith.addf %321, %322 : vector<8x128xf32>
    %cst_76 = arith.constant 0.000000e+00 : f32
    %324 = vector.broadcast %cst_76 : f32 to vector<8x128xf32>
    %325 = arith.subf %324, %323 : vector<8x128xf32>
    %326 = math.exp %325 : vector<8x128xf32>
    %cst_77 = arith.constant 1.000000e+00 : f32
    %327 = vector.broadcast %cst_77 : f32 to vector<8x128xf32>
    %328 = arith.addf %327, %326 : vector<8x128xf32>
    %329 = tpu.reciprocal %328 {approx = true} : vector<8x128xf32> -> vector<8x128xf32>
    %330 = math.tanh %323 : vector<8x128xf32>
    %331 = vector.extract_strided_slice %329 {offsets = [0, 0], sizes = [8, 32], strides = [1, 1]} : vector<8x128xf32> to vector<8x32xf32>
    %332 = vector.extract_strided_slice %329 {offsets = [0, 32], sizes = [8, 32], strides = [1, 1]} : vector<8x128xf32> to vector<8x32xf32>
    %333 = vector.extract_strided_slice %330 {offsets = [0, 64], sizes = [8, 32], strides = [1, 1]} : vector<8x128xf32> to vector<8x32xf32>
    %334 = vector.extract_strided_slice %329 {offsets = [0, 96], sizes = [8, 32], strides = [1, 1]} : vector<8x128xf32> to vector<8x32xf32>
    %335 = arith.mulf %332, %295 : vector<8x32xf32>
    %336 = arith.mulf %331, %333 : vector<8x32xf32>
    %337 = arith.addf %335, %336 : vector<8x32xf32>
    %338 = math.tanh %337 : vector<8x32xf32>
    %339 = arith.mulf %334, %338 : vector<8x32xf32>
    %340 = arith.truncf %339 : vector<8x32xf32> to vector<8x32xbf16>
    %cst_78 = arith.constant dense<0.000000e+00> : vector<8x128xf32>
    %341 = tpu.matmul %340, %23, %cst_78 {dimension_numbers = #tpu.dot_dimension_numbers<[1], [0], [0], [1], [0, 0, 1, 1], [], []>} : vector<8x32xbf16>, vector<32x128xbf16>, vector<8x128xf32> -> vector<8x128xf32>
    %342 = arith.truncf %318 : vector<8x32xf32> to vector<8x32xbf16>
    %cst_79 = arith.constant dense<0.000000e+00> : vector<8x128xf32>
    %343 = tpu.matmul %342, %25, %cst_79 {dimension_numbers = #tpu.dot_dimension_numbers<[1], [0], [0], [1], [0, 0, 1, 1], [], []>} : vector<8x32xbf16>, vector<32x128xbf16>, vector<8x128xf32> -> vector<8x128xf32>
    %344 = arith.addf %341, %343 : vector<8x128xf32>
    %cst_80 = arith.constant 0.000000e+00 : f32
    %345 = vector.broadcast %cst_80 : f32 to vector<8x128xf32>
    %346 = arith.subf %345, %344 : vector<8x128xf32>
    %347 = math.exp %346 : vector<8x128xf32>
    %cst_81 = arith.constant 1.000000e+00 : f32
    %348 = vector.broadcast %cst_81 : f32 to vector<8x128xf32>
    %349 = arith.addf %348, %347 : vector<8x128xf32>
    %350 = tpu.reciprocal %349 {approx = true} : vector<8x128xf32> -> vector<8x128xf32>
    %351 = math.tanh %344 : vector<8x128xf32>
    %352 = vector.extract_strided_slice %350 {offsets = [0, 0], sizes = [8, 32], strides = [1, 1]} : vector<8x128xf32> to vector<8x32xf32>
    %353 = vector.extract_strided_slice %350 {offsets = [0, 32], sizes = [8, 32], strides = [1, 1]} : vector<8x128xf32> to vector<8x32xf32>
    %354 = vector.extract_strided_slice %351 {offsets = [0, 64], sizes = [8, 32], strides = [1, 1]} : vector<8x128xf32> to vector<8x32xf32>
    %355 = vector.extract_strided_slice %350 {offsets = [0, 96], sizes = [8, 32], strides = [1, 1]} : vector<8x128xf32> to vector<8x32xf32>
    %356 = arith.mulf %353, %316 : vector<8x32xf32>
    %357 = arith.mulf %352, %354 : vector<8x32xf32>
    %358 = arith.addf %356, %357 : vector<8x32xf32>
    %359 = math.tanh %358 : vector<8x32xf32>
    %360 = arith.mulf %355, %359 : vector<8x32xf32>
    %361 = arith.addf %319, %360 : vector<8x32xf32>
    %cst_82 = arith.constant 1.250000e-01 : f32
    %362 = vector.broadcast %cst_82 : f32 to vector<8x32xf32>
    %363 = arith.mulf %361, %362 : vector<8x32xf32>
    %c0_83 = arith.constant 0 : index
    %c0_84 = arith.constant 0 : index
    %364 = vector.load %arg8[%c0_83, %c0_84] : memref<32x2xf32, #tpu.memory_space<vmem>>, vector<32x2xf32>
    %cst_85 = arith.constant dense<0.000000e+00> : vector<8x2xf32>
    %365 = tpu.matmul %363, %364, %cst_85 {dimension_numbers = #tpu.dot_dimension_numbers<[1], [0], [0], [1], [0, 0, 1, 1], [], []>} : vector<8x32xf32>, vector<32x2xf32>, vector<8x2xf32> -> vector<8x2xf32>
    %c0_86 = arith.constant 0 : index
    %c0_87 = arith.constant 0 : index
    %366 = vector.load %arg9[%c0_86, %c0_87] : memref<1x2xf32, #tpu.memory_space<vmem>>, vector<1x2xf32>
    %367 = vector.broadcast %366 : vector<1x2xf32> to vector<8x2xf32>
    %368 = arith.addf %365, %367 : vector<8x2xf32>
    %cst_88 = arith.constant dense<0xFF800000> : vector<8xf32>
    %369 = vector.multi_reduction <maximumf>, %368, %cst_88 [1] : vector<8x2xf32> to vector<8xf32>
    %370 = vector.shape_cast %369 : vector<8xf32> to vector<8x1xf32>
    %371 = vector.broadcast %370 : vector<8x1xf32> to vector<8x2xf32>
    %372 = arith.subf %368, %371 : vector<8x2xf32>
    %373 = math.exp %372 : vector<8x2xf32>
    %cst_89 = arith.constant dense<0.000000e+00> : vector<8xf32>
    %374 = vector.multi_reduction <add>, %373, %cst_89 [1] : vector<8x2xf32> to vector<8xf32>
    %375 = vector.shape_cast %374 : vector<8xf32> to vector<8x1xf32>
    %376 = vector.broadcast %375 : vector<8x1xf32> to vector<8x2xf32>
    %377 = arith.divf %373, %376 : vector<8x2xf32>
    %c0_90 = arith.constant 0 : index
    %c0_91 = arith.constant 0 : index
    %378 = vector.load %arg10[%c0_90, %c0_91] : memref<8x2xf32, #tpu.memory_space<vmem>>, vector<8x2xf32>
    tpu.vector_store %arg10[%c0_90, %c0_91], %377 {strides = array<i32>} : memref<8x2xf32, #tpu.memory_space<vmem>>, vector<8x2xf32>,
    %c0_92 = arith.constant 0 : index
    %c0_93 = arith.constant 0 : index
    %c0_94 = arith.constant 0 : index
    %379 = vector.load %arg11[%c0_92, %c0_93, %c0_94] : memref<2x8x32xf32, #tpu.memory_space<vmem>>, vector<1x8x32xf32>
    %380 = vector.shape_cast %379 : vector<1x8x32xf32> to vector<8x32xf32>
    %381 = vector.shape_cast %339 : vector<8x32xf32> to vector<1x8x32xf32>
    tpu.vector_store %arg11[%c0_92, %c0_93, %c0_94], %381 {strides = array<i32>} : memref<2x8x32xf32, #tpu.memory_space<vmem>>, vector<1x8x32xf32>,
    %c0_95 = arith.constant 0 : index
    %c0_96 = arith.constant 0 : index
    %c0_97 = arith.constant 0 : index
    %382 = vector.load %arg12[%c0_95, %c0_96, %c0_97] : memref<2x8x32xf32, #tpu.memory_space<vmem>>, vector<1x8x32xf32>
    %383 = vector.shape_cast %382 : vector<1x8x32xf32> to vector<8x32xf32>
    %384 = vector.shape_cast %337 : vector<8x32xf32> to vector<1x8x32xf32>
    tpu.vector_store %arg12[%c0_95, %c0_96, %c0_97], %384 {strides = array<i32>} : memref<2x8x32xf32, #tpu.memory_space<vmem>>, vector<1x8x32xf32>,
    %c1_98 = arith.constant 1 : index
    %c0_99 = arith.constant 0 : index
    %c0_100 = arith.constant 0 : index
    %385 = vector.load %arg11[%c1_98, %c0_99, %c0_100] : memref<2x8x32xf32, #tpu.memory_space<vmem>>, vector<1x8x32xf32>
    %386 = vector.shape_cast %385 : vector<1x8x32xf32> to vector<8x32xf32>
    %387 = vector.shape_cast %360 : vector<8x32xf32> to vector<1x8x32xf32>
    tpu.vector_store %arg11[%c1_98, %c0_99, %c0_100], %387 {strides = array<i32>} : memref<2x8x32xf32, #tpu.memory_space<vmem>>, vector<1x8x32xf32>,
    %c1_101 = arith.constant 1 : index
    %c0_102 = arith.constant 0 : index
    %c0_103 = arith.constant 0 : index
    %388 = vector.load %arg12[%c1_101, %c0_102, %c0_103] : memref<2x8x32xf32, #tpu.memory_space<vmem>>, vector<1x8x32xf32>
    %389 = vector.shape_cast %388 : vector<1x8x32xf32> to vector<8x32xf32>
    %390 = vector.shape_cast %358 : vector<8x32xf32> to vector<1x8x32xf32>
    tpu.vector_store %arg12[%c1_101, %c0_102, %c0_103], %390 {strides = array<i32>} : memref<2x8x32xf32, #tpu.memory_space<vmem>>, vector<1x8x32xf32>,
    return
  }
}

</mosaic_0001>

<llo_original>
// kernel: basic_rnn_forward.1
$region0: #{basic_rnn_forward.1}
  #allocation0 [shape = 'u32[]', space=smem, size = 0x4, offset = 0x4, fixed_abs, tag = 'smem constant byte address 0x4 - core index']
  #allocation1 [shape = 'u32[144,128]{1,0:T(1,128)}', space=vmem, size = 0x12000, scoped, tag = 'internal scratch']
  %s0 = inlined_call_operand.vmem [shape: s32[64,1], index: 0, kind: input, shape index: {}]
  %s1 = inlined_call_operand.vmem [shape: bf16[128,32], index: 1, kind: input, shape index: {}]
  %s2 = inlined_call_operand.vmem [shape: bf16[32,128], index: 2, kind: input, shape index: {}]
  %s3 = inlined_call_operand.vmem [shape: bf16[32,128], index: 3, kind: input, shape index: {}]
  %s4 = inlined_call_operand.vmem [shape: bf16[1,32,128], index: 4, kind: input, shape index: {}]
  %s5 = inlined_call_operand.vmem [shape: bf16[1,32,128], index: 5, kind: input, shape index: {}]
  %s6 = inlined_call_operand.vmem [shape: f32[2,8,32], index: 6, kind: input, shape index: {}]
  %s7 = inlined_call_operand.vmem [shape: f32[2,8,32], index: 7, kind: input, shape index: {}]
  %s8 = inlined_call_operand.vmem [shape: f32[32,2], index: 8, kind: input, shape index: {}]
  %s9 = inlined_call_operand.vmem [shape: f32[1,2], index: 9, kind: input, shape index: {}]
  %s10 = inlined_call_operand.vmem [shape: f32[8,2], index: 10, kind: output, shape index: {0}]
  %s11 = inlined_call_operand.vmem [shape: f32[2,8,32], index: 11, kind: output, shape index: {1}]
  %s12 = inlined_call_operand.vmem [shape: f32[2,8,32], index: 12, kind: output, shape index: {2}]
  %13 = xla_tuple %s10, %s11, %s12
  %s14 = sld [smem:[#allocation0]]
  $region66: #{basic_rnn_forward.1} parent=0
    _
  %s16 = ssub.s32 1, %s14
  %s17 = scalar_select 0, %s16, %s14
  // Predicated region
  $region2: #{basic_rnn_forward.1} parent=0 // pred_check
    _
  $region3: #{basic_rnn_forward.1} parent=0 // pred_check_branch
    %19 = sbr.rel (0) target = $region5
  $region4: #{basic_rnn_forward.1} parent=0 // pred_region
    _
  $region5: #{basic_rnn_forward.1} parent=0 // pred_fallthru
    _
  // Predicated region
  $region6: #{basic_rnn_forward.1} parent=0 // pred_check
    _
  $region7: #{basic_rnn_forward.1} parent=0 // pred_check_branch
    %21 = sbr.rel (0) target = $region9
  $region8: #{basic_rnn_forward.1} parent=0 // pred_region
    _
  $region9: #{basic_rnn_forward.1} parent=0 // pred_fallthru
    _
  // Predicated region
  $region10: #{basic_rnn_forward.1} parent=0 // pred_check
    _
  $region11: #{basic_rnn_forward.1} parent=0 // pred_check_branch
    %23 = sbr.rel (0) target = $region13
  $region12: #{basic_rnn_forward.1} parent=0 // pred_region
    _
  $region13: #{basic_rnn_forward.1} parent=0 // pred_fallthru
    _
  // Predicated region
  $region14: #{basic_rnn_forward.1} parent=0 // pred_check
    _
  $region15: #{basic_rnn_forward.1} parent=0 // pred_check_branch
    %25 = sbr.rel (0) target = $region17
  $region16: #{basic_rnn_forward.1} parent=0 // pred_region
    _
  $region17: #{basic_rnn_forward.1} parent=0 // pred_fallthru
    _
  // Predicated region
  $region18: #{basic_rnn_forward.1} parent=0 // pred_check
    _
  $region19: #{basic_rnn_forward.1} parent=0 // pred_check_branch
    %27 = sbr.rel (0) target = $region21
  $region20: #{basic_rnn_forward.1} parent=0 // pred_region
    _
  $region21: #{basic_rnn_forward.1} parent=0 // pred_fallthru
    _
  // Predicated region
  $region22: #{basic_rnn_forward.1} parent=0 // pred_check
    _
  $region23: #{basic_rnn_forward.1} parent=0 // pred_check_branch
    %29 = sbr.rel (0) target = $region25
  $region24: #{basic_rnn_forward.1} parent=0 // pred_region
    _
  $region25: #{basic_rnn_forward.1} parent=0 // pred_fallthru
    _
  // Predicated region
  $region26: #{basic_rnn_forward.1} parent=0 // pred_check
    _
  $region27: #{basic_rnn_forward.1} parent=0 // pred_check_branch
    %31 = sbr.rel (0) target = $region29
  $region28: #{basic_rnn_forward.1} parent=0 // pred_region
    _
  $region29: #{basic_rnn_forward.1} parent=0 // pred_fallthru
    _
  // Predicated region
  $region30: #{basic_rnn_forward.1} parent=0 // pred_check
    _
  $region31: #{basic_rnn_forward.1} parent=0 // pred_check_branch
    %33 = sbr.rel (0) target = $region33
  $region32: #{basic_rnn_forward.1} parent=0 // pred_region
    _
  $region33: #{basic_rnn_forward.1} parent=0 // pred_fallthru
    _
  // Predicated region
  $region34: #{basic_rnn_forward.1} parent=0 // pred_check
    _
  $region35: #{basic_rnn_forward.1} parent=0 // pred_check_branch
    %35 = sbr.rel (0) target = $region37
  $region36: #{basic_rnn_forward.1} parent=0 // pred_region
    _
  $region37: #{basic_rnn_forward.1} parent=0 // pred_fallthru
    _
  // Predicated region
  $region38: #{basic_rnn_forward.1} parent=0 // pred_check
    _
  $region39: #{basic_rnn_forward.1} parent=0 // pred_check_branch
    %37 = sbr.rel (0) target = $region41
  $region40: #{basic_rnn_forward.1} parent=0 // pred_region
    _
  $region41: #{basic_rnn_forward.1} parent=0 // pred_fallthru
    _
  %v39 = vld [vmem:[%s0] sm:$0xff]
  %v40 = vld [vmem:[%s0 + $0x8] sm:$0xff]
  %v41 = vld [vmem:[%s0 + $0x10] sm:$0xff]
  %v42 = vld [vmem:[%s0 + $0x18] sm:$0xff]
  %v43 = vld [vmem:[%s0 + $0x20] sm:$0xff]
  %v44 = vld [vmem:[%s0 + $0x28] sm:$0xff]
  %v45 = vld [vmem:[%s0 + $0x30] sm:$0xff]
  %v46 = vld [vmem:[%s0 + $0x38] sm:$0xff]
  %v47 = vlaneseq
  %v48 = vand.u32 %v47, 127
  %49 = vset.pattern.permute.xlu0 0
  %50 = vperm.xlu0 %49, %v39
  %v51 = vpop.permute.xlu0 %50
  %52 = vset.pattern.permute.xlu0 0
  %53 = vperm.xlu0 %52, %v40
  %v54 = vpop.permute.xlu0 %53
  %55 = vset.pattern.permute.xlu0 0
  %56 = vperm.xlu0 %55, %v41
  %v57 = vpop.permute.xlu0 %56
  %58 = vset.pattern.permute.xlu0 0
  %59 = vperm.xlu0 %58, %v42
  %v60 = vpop.permute.xlu0 %59
  %61 = vset.pattern.permute.xlu0 0
  %62 = vperm.xlu0 %61, %v43
  %v63 = vpop.permute.xlu0 %62
  %64 = vset.pattern.permute.xlu0 0
  %65 = vperm.xlu0 %64, %v44
  %v66 = vpop.permute.xlu0 %65
  %67 = vset.pattern.permute.xlu0 0
  %68 = vperm.xlu0 %67, %v45
  %v69 = vpop.permute.xlu0 %68
  %70 = vset.pattern.permute.xlu0 0
  %71 = vperm.xlu0 %70, %v46
  %v72 = vpop.permute.xlu0 %71
  %vm73 = vcmp.eq.s32.totalorder %v51, %v48
  %vm74 = vcmp.eq.s32.totalorder %v54, %v48
  %vm75 = vcmp.eq.s32.totalorder %v57, %v48
  %vm76 = vcmp.eq.s32.totalorder %v60, %v48
  %vm77 = vcmp.eq.s32.totalorder %v63, %v48
  %vm78 = vcmp.eq.s32.totalorder %v66, %v48
  %vm79 = vcmp.eq.s32.totalorder %v69, %v48
  %vm80 = vcmp.eq.s32.totalorder %v72, %v48
  %v81 = vsel %vm73, 1, 0
  %v82 = vsel %vm74, 1, 0
  %v83 = vsel %vm75, 1, 0
  %v84 = vsel %vm76, 1, 0
  %v85 = vsel %vm77, 1, 0
  %v86 = vsel %vm78, 1, 0
  %v87 = vsel %vm79, 1, 0
  %v88 = vsel %vm80, 1, 0
  %v89 = vcvt.s32.f32 %v81
  %v90 = vcvt.s32.f32 %v82
  %v91 = vcvt.s32.f32 %v83
  %v92 = vcvt.s32.f32 %v84
  %v93 = vcvt.s32.f32 %v85
  %v94 = vcvt.s32.f32 %v86
  %v95 = vcvt.s32.f32 %v87
  %v96 = vcvt.s32.f32 %v88
  %v97 = vpack.c.bf16 %v90, %v89
  %v98 = vpack.c.bf16 %v92, %v91
  %v99 = vpack.c.bf16 %v94, %v93
  %v100 = vpack.c.bf16 %v96, %v95
  %v101 = vld [vmem:[%s1] sm:$0xf]
  %v102 = vld [vmem:[%s1 + $0x4] sm:$0xf]
  %v103 = vld [vmem:[%s1 + $0x8] sm:$0xf]
  %v104 = vld [vmem:[%s1 + $0xc] sm:$0xf]
  %v105 = vld [vmem:[%s1 + $0x10] sm:$0xf]
  %v106 = vld [vmem:[%s1 + $0x14] sm:$0xf]
  %v107 = vld [vmem:[%s1 + $0x18] sm:$0xf]
  %v108 = vld [vmem:[%s1 + $0x1c] sm:$0xf]
  %v109 = vld [vmem:[%s1 + $0x20] sm:$0xf]
  %v110 = vld [vmem:[%s1 + $0x24] sm:$0xf]
  %v111 = vld [vmem:[%s1 + $0x28] sm:$0xf]
  %v112 = vld [vmem:[%s1 + $0x2c] sm:$0xf]
  %v113 = vld [vmem:[%s1 + $0x30] sm:$0xf]
  %v114 = vld [vmem:[%s1 + $0x34] sm:$0xf]
  %v115 = vld [vmem:[%s1 + $0x38] sm:$0xf]
  %v116 = vld [vmem:[%s1 + $0x3c] sm:$0xf]
  %v133 = vunpack.c.l.b16 %v101
  %v134 = vunpack.c.l.b16 %v102
  %v135 = vunpack.c.l.b16 %v103
  %v136 = vunpack.c.l.b16 %v104
  %v137 = vunpack.c.l.b16 %v105
  %v138 = vunpack.c.l.b16 %v106
  %v139 = vunpack.c.l.b16 %v107
  %v140 = vunpack.c.l.b16 %v108
  %v141 = vunpack.c.l.b16 %v109
  %v142 = vunpack.c.l.b16 %v110
  %v143 = vunpack.c.l.b16 %v111
  %v144 = vunpack.c.l.b16 %v112
  %v145 = vunpack.c.l.b16 %v113
  %v146 = vunpack.c.l.b16 %v114
  %v147 = vunpack.c.l.b16 %v115
  %v148 = vunpack.c.l.b16 %v116
  %v149 = vpack.c.b16 %v134, %v133
  %v150 = vpack.c.b16 %v136, %v135
  %v151 = vpack.c.b16 %v138, %v137
  %v152 = vpack.c.b16 %v140, %v139
  %v153 = vpack.c.b16 %v142, %v141
  %v154 = vpack.c.b16 %v144, %v143
  %v155 = vpack.c.b16 %v146, %v145
  %v156 = vpack.c.b16 %v148, %v147
  %165 = vmatprep.subr.bf16.mxu0 0
  %166 = vmatpush1.bf16.msra.mxu0 %v156
  %167 = vmatprep.subr.bf16.mxu0 0
  %168 = vmatpush1.bf16.msra.mxu0 %v155
  %169 = vmatprep.subr.bf16.mxu0 0
  %170 = vmatpush1.bf16.msra.mxu0 %v154
  %171 = vmatprep.subr.bf16.mxu0 0
  %172 = vmatpush1.bf16.msra.mxu0 %v153
  %173 = vmatprep.subr.bf16.mxu0 0
  %174 = vmatpush1.bf16.msra.mxu0 %v152
  %175 = vmatprep.subr.bf16.mxu0 0
  %176 = vmatpush1.bf16.msra.mxu0 %v151
  %177 = vmatprep.subr.bf16.mxu0 0
  %178 = vmatpush1.bf16.msra.mxu0 %v150
  %179 = vmatprep.subr.bf16.mxu0 0
  %180 = vmatpush1.bf16.msra.mxu0 %v149
  %181 = vmatprep.subr.bf16.mxu0 0
  %182 = vmatpush2.bf16.msra.mxu0 0
  %183 = vmatprep.subr.bf16.mxu0 0
  %184 = vmatpush2.bf16.msra.mxu0 0
  %185 = vmatprep.subr.bf16.mxu0 0
  %186 = vmatpush2.bf16.msra.mxu0 0
  %187 = vmatprep.subr.bf16.mxu0 0
  %188 = vmatpush2.bf16.msra.mxu0 0
  %189 = vmatprep.subr.bf16.mxu0 0
  %190 = vmatpush2.bf16.msra.mxu0 0
  %191 = vmatprep.subr.bf16.mxu0 0
  %192 = vmatpush2.bf16.msra.mxu0 0
  %193 = vmatprep.subr.bf16.mxu0 0
  %194 = vmatpush2.bf16.msra.mxu0 0
  %195 = vmatprep.subr.bf16.mxu0 0
  %196 = vmatpush2.bf16.msra.mxu0 0
  %197 = vmatprep.mubr.bf16.mxu0 0
  %198 = vmatmul.mubr.bf16.gmra.mxu0 %v97
  %v199 = vpop.f32.mrf.mxu0
  %v200 = vadd.f32 0.0, %v199
  %v201 = vpop.f32.mrf.mxu0
  %v202 = vpop.f32.mrf.mxu0
  %v203 = vadd.f32 0.0, %v202
  %v204 = vpop.f32.mrf.mxu0
  %205 = vmatprep.mubr.bf16.mxu0 0
  %206 = vmatmul.mubr.bf16.gmra.mxu0 %v98
  %v207 = vpop.f32.mrf.mxu0
  %v208 = vadd.f32 0.0, %v207
  %v209 = vpop.f32.mrf.mxu0
  %v210 = vpop.f32.mrf.mxu0
  %v211 = vadd.f32 0.0, %v210
  %v212 = vpop.f32.mrf.mxu0
  %213 = vmatprep.mubr.bf16.mxu0 0
  %214 = vmatmul.mubr.bf16.gmra.mxu0 %v99
  %v215 = vpop.f32.mrf.mxu0
  %v216 = vadd.f32 0.0, %v215
  %v217 = vpop.f32.mrf.mxu0
  %v218 = vpop.f32.mrf.mxu0
  %v219 = vadd.f32 0.0, %v218
  %v220 = vpop.f32.mrf.mxu0
  %221 = vmatprep.mubr.bf16.mxu0 0
  %222 = vmatmul.mubr.bf16.gmra.mxu0 %v100
  %v223 = vpop.f32.mrf.mxu0
  %v224 = vadd.f32 0.0, %v223
  %v225 = vpop.f32.mrf.mxu0
  %v226 = vpop.f32.mrf.mxu0
  %v227 = vadd.f32 0.0, %v226
  %v228 = vpop.f32.mrf.mxu0
  %229 = vdwg.mxu0
  %v230 = vpack.c.bf16 %v203, %v200
  %v231 = vpack.c.bf16 %v211, %v208
  %v232 = vpack.c.bf16 %v219, %v216
  %v233 = vpack.c.bf16 %v227, %v224
  %v234 = vld [vmem:[%s2] sm:$0xf]
  %v235 = vld [vmem:[%s2 + $0x4] sm:$0xf]
  %v236 = vld [vmem:[%s2 + $0x8] sm:$0xf]
  %v237 = vld [vmem:[%s2 + $0xc] sm:$0xf]
  %v242 = vunpack.c.l.b16 %v234
  %v243 = vunpack.c.l.b16 %v235
  %v244 = vunpack.c.l.b16 %v236
  %v245 = vunpack.c.l.b16 %v237
  %v246 = vpack.c.b16 %v243, %v242
  %v247 = vpack.c.b16 %v245, %v244
  %vm250 = vcmask 261120
  %v252 = vsel %vm250, %v230, 0
  %v255 = vsel %vm250, %v231, 0
  %v258 = vsel %vm250, %v232, 0
  %v261 = vsel %vm250, %v233, 0
  %263 = vmatprep.subr.bf16.mxu0 0
  %264 = vmatpush1.bf16.msra.mxu0 0
  %265 = vmatprep.subr.bf16.mxu0 0
  %266 = vmatpush1.bf16.msra.mxu0 0
  %267 = vmatprep.subr.bf16.mxu0 0
  %268 = vmatpush1.bf16.msra.mxu0 0
  %269 = vmatprep.subr.bf16.mxu0 0
  %270 = vmatpush1.bf16.msra.mxu0 0
  %271 = vmatprep.subr.bf16.mxu0 0
  %272 = vmatpush1.bf16.msra.mxu0 0
  %273 = vmatprep.subr.bf16.mxu0 0
  %274 = vmatpush1.bf16.msra.mxu0 0
  %275 = vmatprep.subr.bf16.mxu0 0
  %276 = vmatpush1.bf16.msra.mxu0 %v247
  %277 = vmatprep.subr.bf16.mxu0 0
  %278 = vmatpush1.bf16.msra.mxu0 %v246
  %279 = vmatprep.subr.bf16.mxu0 0
  %280 = vmatpush2.bf16.msra.mxu0 0
  %281 = vmatprep.subr.bf16.mxu0 0
  %282 = vmatpush2.bf16.msra.mxu0 0
  %283 = vmatprep.subr.bf16.mxu0 0
  %284 = vmatpush2.bf16.msra.mxu0 0
  %285 = vmatprep.subr.bf16.mxu0 0
  %286 = vmatpush2.bf16.msra.mxu0 0
  %287 = vmatprep.subr.bf16.mxu0 0
  %288 = vmatpush2.bf16.msra.mxu0 0
  %289 = vmatprep.subr.bf16.mxu0 0
  %290 = vmatpush2.bf16.msra.mxu0 0
  %291 = vmatprep.subr.bf16.mxu0 0
  %292 = vmatpush2.bf16.msra.mxu0 0
  %293 = vmatprep.subr.bf16.mxu0 0
  %294 = vmatpush2.bf16.msra.mxu0 0
  %295 = vmatprep.mubr.bf16.mxu0 0
  %296 = vmatmul.mubr.bf16.gmra.mxu0 %v252
  %v297 = vpop.f32.mrf.mxu0
  %v298 = vadd.f32 0.0, %v297
  %v299 = vpop.f32.mrf.mxu0
  %v300 = vpop.f32.mrf.mxu0
  %v301 = vadd.f32 0.0, %v300
  %v302 = vpop.f32.mrf.mxu0
  %303 = vmatprep.mubr.bf16.mxu0 0
  %304 = vmatmul.mubr.bf16.gmra.mxu0 %v255
  %v305 = vpop.f32.mrf.mxu0
  %v306 = vadd.f32 0.0, %v305
  %v307 = vpop.f32.mrf.mxu0
  %v308 = vpop.f32.mrf.mxu0
  %v309 = vadd.f32 0.0, %v308
  %v310 = vpop.f32.mrf.mxu0
  %311 = vmatprep.mubr.bf16.mxu0 0
  %312 = vmatmul.mubr.bf16.gmra.mxu0 %v258
  %v313 = vpop.f32.mrf.mxu0
  %v314 = vadd.f32 0.0, %v313
  %v315 = vpop.f32.mrf.mxu0
  %v316 = vpop.f32.mrf.mxu0
  %v317 = vadd.f32 0.0, %v316
  %v318 = vpop.f32.mrf.mxu0
  %319 = vmatprep.mubr.bf16.mxu0 0
  %320 = vmatmul.mubr.bf16.gmra.mxu0 %v261
  %v321 = vpop.f32.mrf.mxu0
  %v322 = vadd.f32 0.0, %v321
  %v323 = vpop.f32.mrf.mxu0
  %v324 = vpop.f32.mrf.mxu0
  %v325 = vadd.f32 0.0, %v324
  %v326 = vpop.f32.mrf.mxu0
  %327 = vdwg.mxu0
  %v328 = vld [vmem:[%s6] sm:$0xff]
  %s329 = scalar_lea.vmem %s6, 8
  %v330 = vld [vmem:[%s329] sm:$0xff]
  %v331 = vld [vmem:[%s7] sm:$0xff]
  %s332 = scalar_lea.vmem %s7, 8
  %v333 = vld [vmem:[%s332] sm:$0xff]
  %v334 = vld [vmem:[%s3] sm:$0xf]
  %v335 = vld [vmem:[%s3 + $0x4] sm:$0xf]
  %v336 = vld [vmem:[%s3 + $0x8] sm:$0xf]
  %v337 = vld [vmem:[%s3 + $0xc] sm:$0xf]
  %v338 = vld [vmem:[%s4] sm:$0xf]
  %v339 = vld [vmem:[%s4 + $0x4] sm:$0xf]
  %v340 = vld [vmem:[%s4 + $0x8] sm:$0xf]
  %v341 = vld [vmem:[%s4 + $0xc] sm:$0xf]
  %v342 = vld [vmem:[%s5] sm:$0xf]
  %v343 = vld [vmem:[%s5 + $0x4] sm:$0xf]
  %v344 = vld [vmem:[%s5 + $0x8] sm:$0xf]
  %v345 = vld [vmem:[%s5 + $0xc] sm:$0xf]
  %v346 = vpack.c.bf16 %v328, %v328
  %v351 = vunpack.c.l.b16 %v334
  %v352 = vunpack.c.l.b16 %v335
  %v353 = vunpack.c.l.b16 %v336
  %v354 = vunpack.c.l.b16 %v337
  %v355 = vpack.c.b16 %v352, %v351
  %v356 = vpack.c.b16 %v354, %v353
  %v360 = vsel %vm250, %v346, 0
  %362 = vmatprep.subr.bf16.mxu0 0
  %363 = vmatpush1.bf16.msra.mxu0 0
  %364 = vmatprep.subr.bf16.mxu0 0
  %365 = vmatpush1.bf16.msra.mxu0 0
  %366 = vmatprep.subr.bf16.mxu0 0
  %367 = vmatpush1.bf16.msra.mxu0 0
  %368 = vmatprep.subr.bf16.mxu0 0
  %369 = vmatpush1.bf16.msra.mxu0 0
  %370 = vmatprep.subr.bf16.mxu0 0
  %371 = vmatpush1.bf16.msra.mxu0 0
  %372 = vmatprep.subr.bf16.mxu0 0
  %373 = vmatpush1.bf16.msra.mxu0 0
  %374 = vmatprep.subr.bf16.mxu0 0
  %375 = vmatpush1.bf16.msra.mxu0 %v356
  %376 = vmatprep.subr.bf16.mxu0 0
  %377 = vmatpush1.bf16.msra.mxu0 %v355
  %378 = vmatprep.subr.bf16.mxu0 0
  %379 = vmatpush2.bf16.msra.mxu0 0
  %380 = vmatprep.subr.bf16.mxu0 0
  %381 = vmatpush2.bf16.msra.mxu0 0
  %382 = vmatprep.subr.bf16.mxu0 0
  %383 = vmatpush2.bf16.msra.mxu0 0
  %384 = vmatprep.subr.bf16.mxu0 0
  %385 = vmatpush2.bf16.msra.mxu0 0
  %386 = vmatprep.subr.bf16.mxu0 0
  %387 = vmatpush2.bf16.msra.mxu0 0
  %388 = vmatprep.subr.bf16.mxu0 0
  %389 = vmatpush2.bf16.msra.mxu0 0
  %390 = vmatprep.subr.bf16.mxu0 0
  %391 = vmatpush2.bf16.msra.mxu0 0
  %392 = vmatprep.subr.bf16.mxu0 0
  %393 = vmatpush2.bf16.msra.mxu0 0
  %394 = vmatprep.mubr.bf16.mxu0 0
  %395 = vmatmul.mubr.bf16.gmra.mxu0 %v360
  %v396 = vpop.f32.mrf.mxu0
  %v397 = vadd.f32 %v298, %v396
  %v398 = vpop.f32.mrf.mxu0
  %v399 = vpop.f32.mrf.mxu0
  %v400 = vpop.f32.mrf.mxu0
  %401 = vdwg.mxu0
  %v402 = vsub.f32 0.0, %v397
  %v403 = vmul.f32 %v402, 1.442695
  %v404 = vpow.pop %v403
  %v405 = vadd.f32 %v404, 1.0
  %v406 = vrcp.pop %v405
  %v407 = vtanh.pop %v397
  %409 = vrot.lane.b32.xlu0 %v331, 32
  %v410 = vpop.permute.xlu0 %409
  %v412 = vmul.f32 %v406, %v410
  %414 = vrot.lane.b32.xlu0 %v407, 64
  %v415 = vpop.permute.xlu0 %414
  %v417 = vmul.f32 %v406, %v415
  %419 = vrot.lane.b32.xlu0 %v417, 32
  %v420 = vpop.permute.xlu0 %419
  %v422 = vadd.f32 %v412, %v420
  %v423 = vtanh.pop %v422
  %425 = vrot.lane.b32.xlu0 %v423, 64
  %v426 = vpop.permute.xlu0 %425
  %v428 = vmul.f32 %v406, %v426
  %v429 = vpack.c.bf16 %v428, %v428
  %v430 = vpack.c.bf16 %v330, %v330
  %v435 = vunpack.c.l.b16 %v342
  %v436 = vunpack.c.l.b16 %v343
  %v437 = vunpack.c.l.b16 %v344
  %v438 = vunpack.c.l.b16 %v345
  %v439 = vpack.c.b16 %v436, %v435
  %v440 = vpack.c.b16 %v438, %v437
  %v444 = vsel %vm250, %v430, 0
  %446 = vmatprep.subr.bf16.mxu0 0
  %447 = vmatpush1.bf16.msra.mxu0 0
  %448 = vmatprep.subr.bf16.mxu0 0
  %449 = vmatpush1.bf16.msra.mxu0 0
  %450 = vmatprep.subr.bf16.mxu0 0
  %451 = vmatpush1.bf16.msra.mxu0 0
  %452 = vmatprep.subr.bf16.mxu0 0
  %453 = vmatpush1.bf16.msra.mxu0 0
  %454 = vmatprep.subr.bf16.mxu0 0
  %455 = vmatpush1.bf16.msra.mxu0 0
  %456 = vmatprep.subr.bf16.mxu0 0
  %457 = vmatpush1.bf16.msra.mxu0 0
  %458 = vmatprep.subr.bf16.mxu0 0
  %459 = vmatpush1.bf16.msra.mxu0 %v440
  %460 = vmatprep.subr.bf16.mxu0 0
  %461 = vmatpush1.bf16.msra.mxu0 %v439
  %462 = vmatprep.subr.bf16.mxu0 0
  %463 = vmatpush2.bf16.msra.mxu0 0
  %464 = vmatprep.subr.bf16.mxu0 0
  %465 = vmatpush2.bf16.msra.mxu0 0
  %466 = vmatprep.subr.bf16.mxu0 0
  %467 = vmatpush2.bf16.msra.mxu0 0
  %468 = vmatprep.subr.bf16.mxu0 0
  %469 = vmatpush2.bf16.msra.mxu0 0
  %470 = vmatprep.subr.bf16.mxu0 0
  %471 = vmatpush2.bf16.msra.mxu0 0
  %472 = vmatprep.subr.bf16.mxu0 0
  %473 = vmatpush2.bf16.msra.mxu0 0
  %474 = vmatprep.subr.bf16.mxu0 0
  %475 = vmatpush2.bf16.msra.mxu0 0
  %476 = vmatprep.subr.bf16.mxu0 0
  %477 = vmatpush2.bf16.msra.mxu0 0
  %478 = vmatprep.mubr.bf16.mxu0 0
  %479 = vmatmul.mubr.bf16.gmra.mxu0 %v444
  %v480 = vpop.f32.mrf.mxu0
  %v481 = vadd.f32 0.0, %v480
  %v482 = vpop.f32.mrf.mxu0
  %v483 = vpop.f32.mrf.mxu0
  %v484 = vpop.f32.mrf.mxu0
  %485 = vdwg.mxu0
  %487 = vrot.lane.b32.xlu0 %v429, 32
  %v488 = vpop.permute.xlu0 %487
  %v493 = vunpack.c.l.b16 %v338
  %v494 = vunpack.c.l.b16 %v339
  %v495 = vunpack.c.l.b16 %v340
  %v496 = vunpack.c.l.b16 %v341
  %v497 = vpack.c.b16 %v494, %v493
  %v498 = vpack.c.b16 %v496, %v495
  %v502 = vsel %vm250, %v488, 0
  %504 = vmatprep.subr.bf16.mxu0 0
  %505 = vmatpush1.bf16.msra.mxu0 0
  %506 = vmatprep.subr.bf16.mxu0 0
  %507 = vmatpush1.bf16.msra.mxu0 0
  %508 = vmatprep.subr.bf16.mxu0 0
  %509 = vmatpush1.bf16.msra.mxu0 0
  %510 = vmatprep.subr.bf16.mxu0 0
  %511 = vmatpush1.bf16.msra.mxu0 0
  %512 = vmatprep.subr.bf16.mxu0 0
  %513 = vmatpush1.bf16.msra.mxu0 0
  %514 = vmatprep.subr.bf16.mxu0 0
  %515 = vmatpush1.bf16.msra.mxu0 0
  %516 = vmatprep.subr.bf16.mxu0 0
  %517 = vmatpush1.bf16.msra.mxu0 %v498
  %518 = vmatprep.subr.bf16.mxu0 0
  %519 = vmatpush1.bf16.msra.mxu0 %v497
  %520 = vmatprep.subr.bf16.mxu0 0
  %521 = vmatpush2.bf16.msra.mxu0 0
  %522 = vmatprep.subr.bf16.mxu0 0
  %523 = vmatpush2.bf16.msra.mxu0 0
  %524 = vmatprep.subr.bf16.mxu0 0
  %525 = vmatpush2.bf16.msra.mxu0 0
  %526 = vmatprep.subr.bf16.mxu0 0
  %527 = vmatpush2.bf16.msra.mxu0 0
  %528 = vmatprep.subr.bf16.mxu0 0
  %529 = vmatpush2.bf16.msra.mxu0 0
  %530 = vmatprep.subr.bf16.mxu0 0
  %531 = vmatpush2.bf16.msra.mxu0 0
  %532 = vmatprep.subr.bf16.mxu0 0
  %533 = vmatpush2.bf16.msra.mxu0 0
  %534 = vmatprep.subr.bf16.mxu0 0
  %535 = vmatpush2.bf16.msra.mxu0 0
  %536 = vmatprep.mubr.bf16.mxu0 0
  %537 = vmatmul.mubr.bf16.gmra.mxu0 %v502
  %v538 = vpop.f32.mrf.mxu0
  %v539 = vadd.f32 %v481, %v538
  %v540 = vpop.f32.mrf.mxu0
  %v541 = vpop.f32.mrf.mxu0
  %v542 = vpop.f32.mrf.mxu0
  %543 = vdwg.mxu0
  %v544 = vsub.f32 0.0, %v539
  %v545 = vmul.f32 %v544, 1.442695
  %v546 = vpow.pop %v545
  %v547 = vadd.f32 %v546, 1.0
  %v548 = vrcp.pop %v547
  %v549 = vtanh.pop %v539
  %551 = vrot.lane.b32.xlu0 %v333, 32
  %v552 = vpop.permute.xlu0 %551
  %v554 = vmul.f32 %v548, %v552
  %556 = vrot.lane.b32.xlu0 %v549, 64
  %v557 = vpop.permute.xlu0 %556
  %v559 = vmul.f32 %v548, %v557
  %561 = vrot.lane.b32.xlu0 %v559, 32
  %v562 = vpop.permute.xlu0 %561
  %v564 = vadd.f32 %v554, %v562
  %v565 = vtanh.pop %v564
  %567 = vrot.lane.b32.xlu0 %v565, 64
  %v568 = vpop.permute.xlu0 %567
  %v570 = vmul.f32 %v548, %v568
  %v571 = vadd.f32 %v570, 0.0
  %572 = vmatprep.subr.bf16.mxu0 0
  %573 = vmatpush1.bf16.msra.mxu0 0
  %574 = vmatprep.subr.bf16.mxu0 0
  %575 = vmatpush1.bf16.msra.mxu0 0
  %576 = vmatprep.subr.bf16.mxu0 0
  %577 = vmatpush1.bf16.msra.mxu0 0
  %578 = vmatprep.subr.bf16.mxu0 0
  %579 = vmatpush1.bf16.msra.mxu0 0
  %580 = vmatprep.subr.bf16.mxu0 0
  %581 = vmatpush1.bf16.msra.mxu0 0
  %582 = vmatprep.subr.bf16.mxu0 0
  %583 = vmatpush1.bf16.msra.mxu0 0
  %584 = vmatprep.subr.bf16.mxu0 0
  %585 = vmatpush1.bf16.msra.mxu0 %v356
  %586 = vmatprep.subr.bf16.mxu0 0
  %587 = vmatpush1.bf16.msra.mxu0 %v355
  %588 = vmatprep.subr.bf16.mxu0 0
  %589 = vmatpush2.bf16.msra.mxu0 0
  %590 = vmatprep.subr.bf16.mxu0 0
  %591 = vmatpush2.bf16.msra.mxu0 0
  %592 = vmatprep.subr.bf16.mxu0 0
  %593 = vmatpush2.bf16.msra.mxu0 0
  %594 = vmatprep.subr.bf16.mxu0 0
  %595 = vmatpush2.bf16.msra.mxu0 0
  %596 = vmatprep.subr.bf16.mxu0 0
  %597 = vmatpush2.bf16.msra.mxu0 0
  %598 = vmatprep.subr.bf16.mxu0 0
  %599 = vmatpush2.bf16.msra.mxu0 0
  %600 = vmatprep.subr.bf16.mxu0 0
  %601 = vmatpush2.bf16.msra.mxu0 0
  %602 = vmatprep.subr.bf16.mxu0 0
  %603 = vmatpush2.bf16.msra.mxu0 0
  %604 = vmatprep.mubr.bf16.mxu0 0
  %605 = vmatmul.mubr.bf16.gmra.mxu0 %v502
  %v606 = vpop.f32.mrf.mxu0
  %v607 = vadd.f32 %v301, %v606
  %v608 = vpop.f32.mrf.mxu0
  %v609 = vpop.f32.mrf.mxu0
  %v610 = vpop.f32.mrf.mxu0
  %611 = vdwg.mxu0
  %v612 = vsub.f32 0.0, %v607
  %v613 = vmul.f32 %v612, 1.442695
  %v614 = vpow.pop %v613
  %v615 = vadd.f32 %v614, 1.0
  %v616 = vrcp.pop %v615
  %v617 = vtanh.pop %v607
  %v618 = vmul.f32 %v616, %v422
  %620 = vrot.lane.b32.xlu0 %v617, 64
  %v621 = vpop.permute.xlu0 %620
  %v623 = vmul.f32 %v616, %v621
  %625 = vrot.lane.b32.xlu0 %v623, 32
  %v626 = vpop.permute.xlu0 %625
  %v628 = vadd.f32 %v618, %v626
  %v629 = vtanh.pop %v628
  %631 = vrot.lane.b32.xlu0 %v629, 64
  %v632 = vpop.permute.xlu0 %631
  %v634 = vmul.f32 %v616, %v632
  %v635 = vpack.c.bf16 %v634, %v634
  %v636 = vpack.c.bf16 %v570, %v570
  %638 = vrot.lane.b32.xlu0 %v636, 32
  %v639 = vpop.permute.xlu0 %638
  %v641 = vsel %vm250, %v639, 0
  %643 = vmatprep.subr.bf16.mxu0 0
  %644 = vmatpush1.bf16.msra.mxu0 0
  %645 = vmatprep.subr.bf16.mxu0 0
  %646 = vmatpush1.bf16.msra.mxu0 0
  %647 = vmatprep.subr.bf16.mxu0 0
  %648 = vmatpush1.bf16.msra.mxu0 0
  %649 = vmatprep.subr.bf16.mxu0 0
  %650 = vmatpush1.bf16.msra.mxu0 0
  %651 = vmatprep.subr.bf16.mxu0 0
  %652 = vmatpush1.bf16.msra.mxu0 0
  %653 = vmatprep.subr.bf16.mxu0 0
  %654 = vmatpush1.bf16.msra.mxu0 0
  %655 = vmatprep.subr.bf16.mxu0 0
  %656 = vmatpush1.bf16.msra.mxu0 %v440
  %657 = vmatprep.subr.bf16.mxu0 0
  %658 = vmatpush1.bf16.msra.mxu0 %v439
  %659 = vmatprep.subr.bf16.mxu0 0
  %660 = vmatpush2.bf16.msra.mxu0 0
  %661 = vmatprep.subr.bf16.mxu0 0
  %662 = vmatpush2.bf16.msra.mxu0 0
  %663 = vmatprep.subr.bf16.mxu0 0
  %664 = vmatpush2.bf16.msra.mxu0 0
  %665 = vmatprep.subr.bf16.mxu0 0
  %666 = vmatpush2.bf16.msra.mxu0 0
  %667 = vmatprep.subr.bf16.mxu0 0
  %668 = vmatpush2.bf16.msra.mxu0 0
  %669 = vmatprep.subr.bf16.mxu0 0
  %670 = vmatpush2.bf16.msra.mxu0 0
  %671 = vmatprep.subr.bf16.mxu0 0
  %672 = vmatpush2.bf16.msra.mxu0 0
  %673 = vmatprep.subr.bf16.mxu0 0
  %674 = vmatpush2.bf16.msra.mxu0 0
  %675 = vmatprep.mubr.bf16.mxu0 0
  %676 = vmatmul.mubr.bf16.gmra.mxu0 %v641
  %v677 = vpop.f32.mrf.mxu0
  %v678 = vadd.f32 0.0, %v677
  %v679 = vpop.f32.mrf.mxu0
  %v680 = vpop.f32.mrf.mxu0
  %v681 = vpop.f32.mrf.mxu0
  %682 = vdwg.mxu0
  %684 = vrot.lane.b32.xlu0 %v635, 32
  %v685 = vpop.permute.xlu0 %684
  %v687 = vsel %vm250, %v685, 0
  %689 = vmatprep.subr.bf16.mxu0 0
  %690 = vmatpush1.bf16.msra.mxu0 0
  %691 = vmatprep.subr.bf16.mxu0 0
  %692 = vmatpush1.bf16.msra.mxu0 0
  %693 = vmatprep.subr.bf16.mxu0 0
  %694 = vmatpush1.bf16.msra.mxu0 0
  %695 = vmatprep.subr.bf16.mxu0 0
  %696 = vmatpush1.bf16.msra.mxu0 0
  %697 = vmatprep.subr.bf16.mxu0 0
  %698 = vmatpush1.bf16.msra.mxu0 0
  %699 = vmatprep.subr.bf16.mxu0 0
  %700 = vmatpush1.bf16.msra.mxu0 0
  %701 = vmatprep.subr.bf16.mxu0 0
  %702 = vmatpush1.bf16.msra.mxu0 %v498
  %703 = vmatprep.subr.bf16.mxu0 0
  %704 = vmatpush1.bf16.msra.mxu0 %v497
  %705 = vmatprep.subr.bf16.mxu0 0
  %706 = vmatpush2.bf16.msra.mxu0 0
  %707 = vmatprep.subr.bf16.mxu0 0
  %708 = vmatpush2.bf16.msra.mxu0 0
  %709 = vmatprep.subr.bf16.mxu0 0
  %710 = vmatpush2.bf16.msra.mxu0 0
  %711 = vmatprep.subr.bf16.mxu0 0
  %712 = vmatpush2.bf16.msra.mxu0 0
  %713 = vmatprep.subr.bf16.mxu0 0
  %714 = vmatpush2.bf16.msra.mxu0 0
  %715 = vmatprep.subr.bf16.mxu0 0
  %716 = vmatpush2.bf16.msra.mxu0 0
  %717 = vmatprep.subr.bf16.mxu0 0
  %718 = vmatpush2.bf16.msra.mxu0 0
  %719 = vmatprep.subr.bf16.mxu0 0
  %720 = vmatpush2.bf16.msra.mxu0 0
  %721 = vmatprep.mubr.bf16.mxu0 0
  %722 = vmatmul.mubr.bf16.gmra.mxu0 %v687
  %v723 = vpop.f32.mrf.mxu0
  %v724 = vadd.f32 %v678, %v723
  %v725 = vpop.f32.mrf.mxu0
  %v726 = vpop.f32.mrf.mxu0
  %v727 = vpop.f32.mrf.mxu0
  %728 = vdwg.mxu0
  %v729 = vsub.f32 0.0, %v724
  %v730 = vmul.f32 %v729, 1.442695
  %v731 = vpow.pop %v730
  %v732 = vadd.f32 %v731, 1.0
  %v733 = vrcp.pop %v732
  %v734 = vtanh.pop %v724
  %v735 = vmul.f32 %v733, %v564
  %737 = vrot.lane.b32.xlu0 %v734, 64
  %v738 = vpop.permute.xlu0 %737
  %v740 = vmul.f32 %v733, %v738
  %742 = vrot.lane.b32.xlu0 %v740, 32
  %v743 = vpop.permute.xlu0 %742
  %v745 = vadd.f32 %v735, %v743
  %v746 = vtanh.pop %v745
  %748 = vrot.lane.b32.xlu0 %v746, 64
  %v749 = vpop.permute.xlu0 %748
  %v751 = vmul.f32 %v733, %v749
  %v752 = vadd.f32 %v571, %v751
  %753 = vmatprep.subr.bf16.mxu0 0
  %754 = vmatpush1.bf16.msra.mxu0 0
  %755 = vmatprep.subr.bf16.mxu0 0
  %756 = vmatpush1.bf16.msra.mxu0 0
  %757 = vmatprep.subr.bf16.mxu0 0
  %758 = vmatpush1.bf16.msra.mxu0 0
  %759 = vmatprep.subr.bf16.mxu0 0
  %760 = vmatpush1.bf16.msra.mxu0 0
  %761 = vmatprep.subr.bf16.mxu0 0
  %762 = vmatpush1.bf16.msra.mxu0 0
  %763 = vmatprep.subr.bf16.mxu0 0
  %764 = vmatpush1.bf16.msra.mxu0 0
  %765 = vmatprep.subr.bf16.mxu0 0
  %766 = vmatpush1.bf16.msra.mxu0 %v356
  %767 = vmatprep.subr.bf16.mxu0 0
  %768 = vmatpush1.bf16.msra.mxu0 %v355
  %769 = vmatprep.subr.bf16.mxu0 0
  %770 = vmatpush2.bf16.msra.mxu0 0
  %771 = vmatprep.subr.bf16.mxu0 0
  %772 = vmatpush2.bf16.msra.mxu0 0
  %773 = vmatprep.subr.bf16.mxu0 0
  %774 = vmatpush2.bf16.msra.mxu0 0
  %775 = vmatprep.subr.bf16.mxu0 0
  %776 = vmatpush2.bf16.msra.mxu0 0
  %777 = vmatprep.subr.bf16.mxu0 0
  %778 = vmatpush2.bf16.msra.mxu0 0
  %779 = vmatprep.subr.bf16.mxu0 0
  %780 = vmatpush2.bf16.msra.mxu0 0
  %781 = vmatprep.subr.bf16.mxu0 0
  %782 = vmatpush2.bf16.msra.mxu0 0
  %783 = vmatprep.subr.bf16.mxu0 0
  %784 = vmatpush2.bf16.msra.mxu0 0
  %785 = vmatprep.mubr.bf16.mxu0 0
  %786 = vmatmul.mubr.bf16.gmra.mxu0 %v687
  %v787 = vpop.f32.mrf.mxu0
  %v788 = vadd.f32 %v306, %v787
  %v789 = vpop.f32.mrf.mxu0
  %v790 = vpop.f32.mrf.mxu0
  %v791 = vpop.f32.mrf.mxu0
  %792 = vdwg.mxu0
  %v793 = vsub.f32 0.0, %v788
  %v794 = vmul.f32 %v793, 1.442695
  %v795 = vpow.pop %v794
  %v796 = vadd.f32 %v795, 1.0
  %v797 = vrcp.pop %v796
  %v798 = vtanh.pop %v788
  %v799 = vmul.f32 %v797, %v628
  %801 = vrot.lane.b32.xlu0 %v798, 64
  %v802 = vpop.permute.xlu0 %801
  %v804 = vmul.f32 %v797, %v802
  %806 = vrot.lane.b32.xlu0 %v804, 32
  %v807 = vpop.permute.xlu0 %806
  %v809 = vadd.f32 %v799, %v807
  %v810 = vtanh.pop %v809
  %812 = vrot.lane.b32.xlu0 %v810, 64
  %v813 = vpop.permute.xlu0 %812
  %v815 = vmul.f32 %v797, %v813
  %v816 = vpack.c.bf16 %v815, %v815
  %v817 = vpack.c.bf16 %v751, %v751
  %819 = vrot.lane.b32.xlu0 %v817, 32
  %v820 = vpop.permute.xlu0 %819
  %v822 = vsel %vm250, %v820, 0
  %824 = vmatprep.subr.bf16.mxu0 0
  %825 = vmatpush1.bf16.msra.mxu0 0
  %826 = vmatprep.subr.bf16.mxu0 0
  %827 = vmatpush1.bf16.msra.mxu0 0
  %828 = vmatprep.subr.bf16.mxu0 0
  %829 = vmatpush1.bf16.msra.mxu0 0
  %830 = vmatprep.subr.bf16.mxu0 0
  %831 = vmatpush1.bf16.msra.mxu0 0
  %832 = vmatprep.subr.bf16.mxu0 0
  %833 = vmatpush1.bf16.msra.mxu0 0
  %834 = vmatprep.subr.bf16.mxu0 0
  %835 = vmatpush1.bf16.msra.mxu0 0
  %836 = vmatprep.subr.bf16.mxu0 0
  %837 = vmatpush1.bf16.msra.mxu0 %v440
  %838 = vmatprep.subr.bf16.mxu0 0
  %839 = vmatpush1.bf16.msra.mxu0 %v439
  %840 = vmatprep.subr.bf16.mxu0 0
  %841 = vmatpush2.bf16.msra.mxu0 0
  %842 = vmatprep.subr.bf16.mxu0 0
  %843 = vmatpush2.bf16.msra.mxu0 0
  %844 = vmatprep.subr.bf16.mxu0 0
  %845 = vmatpush2.bf16.msra.mxu0 0
  %846 = vmatprep.subr.bf16.mxu0 0
  %847 = vmatpush2.bf16.msra.mxu0 0
  %848 = vmatprep.subr.bf16.mxu0 0
  %849 = vmatpush2.bf16.msra.mxu0 0
  %850 = vmatprep.subr.bf16.mxu0 0
  %851 = vmatpush2.bf16.msra.mxu0 0
  %852 = vmatprep.subr.bf16.mxu0 0
  %853 = vmatpush2.bf16.msra.mxu0 0
  %854 = vmatprep.subr.bf16.mxu0 0
  %855 = vmatpush2.bf16.msra.mxu0 0
  %856 = vmatprep.mubr.bf16.mxu0 0
  %857 = vmatmul.mubr.bf16.gmra.mxu0 %v822
  %v858 = vpop.f32.mrf.mxu0
  %v859 = vadd.f32 0.0, %v858
  %v860 = vpop.f32.mrf.mxu0
  %v861 = vpop.f32.mrf.mxu0
  %v862 = vpop.f32.mrf.mxu0
  %863 = vdwg.mxu0
  %865 = vrot.lane.b32.xlu0 %v816, 32
  %v866 = vpop.permute.xlu0 %865
  %v868 = vsel %vm250, %v866, 0
  %870 = vmatprep.subr.bf16.mxu0 0
  %871 = vmatpush1.bf16.msra.mxu0 0
  %872 = vmatprep.subr.bf16.mxu0 0
  %873 = vmatpush1.bf16.msra.mxu0 0
  %874 = vmatprep.subr.bf16.mxu0 0
  %875 = vmatpush1.bf16.msra.mxu0 0
  %876 = vmatprep.subr.bf16.mxu0 0
  %877 = vmatpush1.bf16.msra.mxu0 0
  %878 = vmatprep.subr.bf16.mxu0 0
  %879 = vmatpush1.bf16.msra.mxu0 0
  %880 = vmatprep.subr.bf16.mxu0 0
  %881 = vmatpush1.bf16.msra.mxu0 0
  %882 = vmatprep.subr.bf16.mxu0 0
  %883 = vmatpush1.bf16.msra.mxu0 %v498
  %884 = vmatprep.subr.bf16.mxu0 0
  %885 = vmatpush1.bf16.msra.mxu0 %v497
  %886 = vmatprep.subr.bf16.mxu0 0
  %887 = vmatpush2.bf16.msra.mxu0 0
  %888 = vmatprep.subr.bf16.mxu0 0
  %889 = vmatpush2.bf16.msra.mxu0 0
  %890 = vmatprep.subr.bf16.mxu0 0
  %891 = vmatpush2.bf16.msra.mxu0 0
  %892 = vmatprep.subr.bf16.mxu0 0
  %893 = vmatpush2.bf16.msra.mxu0 0
  %894 = vmatprep.subr.bf16.mxu0 0
  %895 = vmatpush2.bf16.msra.mxu0 0
  %896 = vmatprep.subr.bf16.mxu0 0
  %897 = vmatpush2.bf16.msra.mxu0 0
  %898 = vmatprep.subr.bf16.mxu0 0
  %899 = vmatpush2.bf16.msra.mxu0 0
  %900 = vmatprep.subr.bf16.mxu0 0
  %901 = vmatpush2.bf16.msra.mxu0 0
  %902 = vmatprep.mubr.bf16.mxu0 0
  %903 = vmatmul.mubr.bf16.gmra.mxu0 %v868
  %v904 = vpop.f32.mrf.mxu0
  %v905 = vadd.f32 %v859, %v904
  %v906 = vpop.f32.mrf.mxu0
  %v907 = vpop.f32.mrf.mxu0
  %v908 = vpop.f32.mrf.mxu0
  %909 = vdwg.mxu0
  %v910 = vsub.f32 0.0, %v905
  %v911 = vmul.f32 %v910, 1.442695
  %v912 = vpow.pop %v911
  %v913 = vadd.f32 %v912, 1.0
  %v914 = vrcp.pop %v913
  %v915 = vtanh.pop %v905
  %v916 = vmul.f32 %v914, %v745
  %918 = vrot.lane.b32.xlu0 %v915, 64
  %v919 = vpop.permute.xlu0 %918
  %v921 = vmul.f32 %v914, %v919
  %923 = vrot.lane.b32.xlu0 %v921, 32
  %v924 = vpop.permute.xlu0 %923
  %v926 = vadd.f32 %v916, %v924
  %v927 = vtanh.pop %v926
  %929 = vrot.lane.b32.xlu0 %v927, 64
  %v930 = vpop.permute.xlu0 %929
  %v932 = vmul.f32 %v914, %v930
  %v933 = vadd.f32 %v752, %v932
  %934 = vmatprep.subr.bf16.mxu0 0
  %935 = vmatpush1.bf16.msra.mxu0 0
  %936 = vmatprep.subr.bf16.mxu0 0
  %937 = vmatpush1.bf16.msra.mxu0 0
  %938 = vmatprep.subr.bf16.mxu0 0
  %939 = vmatpush1.bf16.msra.mxu0 0
  %940 = vmatprep.subr.bf16.mxu0 0
  %941 = vmatpush1.bf16.msra.mxu0 0
  %942 = vmatprep.subr.bf16.mxu0 0
  %943 = vmatpush1.bf16.msra.mxu0 0
  %944 = vmatprep.subr.bf16.mxu0 0
  %945 = vmatpush1.bf16.msra.mxu0 0
  %946 = vmatprep.subr.bf16.mxu0 0
  %947 = vmatpush1.bf16.msra.mxu0 %v356
  %948 = vmatprep.subr.bf16.mxu0 0
  %949 = vmatpush1.bf16.msra.mxu0 %v355
  %950 = vmatprep.subr.bf16.mxu0 0
  %951 = vmatpush2.bf16.msra.mxu0 0
  %952 = vmatprep.subr.bf16.mxu0 0
  %953 = vmatpush2.bf16.msra.mxu0 0
  %954 = vmatprep.subr.bf16.mxu0 0
  %955 = vmatpush2.bf16.msra.mxu0 0
  %956 = vmatprep.subr.bf16.mxu0 0
  %957 = vmatpush2.bf16.msra.mxu0 0
  %958 = vmatprep.subr.bf16.mxu0 0
  %959 = vmatpush2.bf16.msra.mxu0 0
  %960 = vmatprep.subr.bf16.mxu0 0
  %961 = vmatpush2.bf16.msra.mxu0 0
  %962 = vmatprep.subr.bf16.mxu0 0
  %963 = vmatpush2.bf16.msra.mxu0 0
  %964 = vmatprep.subr.bf16.mxu0 0
  %965 = vmatpush2.bf16.msra.mxu0 0
  %966 = vmatprep.mubr.bf16.mxu0 0
  %967 = vmatmul.mubr.bf16.gmra.mxu0 %v868
  %v968 = vpop.f32.mrf.mxu0
  %v969 = vadd.f32 %v309, %v968
  %v970 = vpop.f32.mrf.mxu0
  %v971 = vpop.f32.mrf.mxu0
  %v972 = vpop.f32.mrf.mxu0
  %973 = vdwg.mxu0
  %v974 = vsub.f32 0.0, %v969
  %v975 = vmul.f32 %v974, 1.442695
  %v976 = vpow.pop %v975
  %v977 = vadd.f32 %v976, 1.0
  %v978 = vrcp.pop %v977
  %v979 = vtanh.pop %v969
  %v980 = vmul.f32 %v978, %v809
  %982 = vrot.lane.b32.xlu0 %v979, 64
  %v983 = vpop.permute.xlu0 %982
  %v985 = vmul.f32 %v978, %v983
  %987 = vrot.lane.b32.xlu0 %v985, 32
  %v988 = vpop.permute.xlu0 %987
  %v990 = vadd.f32 %v980, %v988
  %v991 = vtanh.pop %v990
  %993 = vrot.lane.b32.xlu0 %v991, 64
  %v994 = vpop.permute.xlu0 %993
  %v996 = vmul.f32 %v978, %v994
  %v997 = vpack.c.bf16 %v996, %v996
  %v998 = vpack.c.bf16 %v932, %v932
  %1000 = vrot.lane.b32.xlu0 %v998, 32
  %v1001 = vpop.permute.xlu0 %1000
  %v1003 = vsel %vm250, %v1001, 0
  %1005 = vmatprep.subr.bf16.mxu0 0
  %1006 = vmatpush1.bf16.msra.mxu0 0
  %1007 = vmatprep.subr.bf16.mxu0 0
  %1008 = vmatpush1.bf16.msra.mxu0 0
  %1009 = vmatprep.subr.bf16.mxu0 0
  %1010 = vmatpush1.bf16.msra.mxu0 0
  %1011 = vmatprep.subr.bf16.mxu0 0
  %1012 = vmatpush1.bf16.msra.mxu0 0
  %1013 = vmatprep.subr.bf16.mxu0 0
  %1014 = vmatpush1.bf16.msra.mxu0 0
  %1015 = vmatprep.subr.bf16.mxu0 0
  %1016 = vmatpush1.bf16.msra.mxu0 0
  %1017 = vmatprep.subr.bf16.mxu0 0
  %1018 = vmatpush1.bf16.msra.mxu0 %v440
  %1019 = vmatprep.subr.bf16.mxu0 0
  %1020 = vmatpush1.bf16.msra.mxu0 %v439
  %1021 = vmatprep.subr.bf16.mxu0 0
  %1022 = vmatpush2.bf16.msra.mxu0 0
  %1023 = vmatprep.subr.bf16.mxu0 0
  %1024 = vmatpush2.bf16.msra.mxu0 0
  %1025 = vmatprep.subr.bf16.mxu0 0
  %1026 = vmatpush2.bf16.msra.mxu0 0
  %1027 = vmatprep.subr.bf16.mxu0 0
  %1028 = vmatpush2.bf16.msra.mxu0 0
  %1029 = vmatprep.subr.bf16.mxu0 0
  %1030 = vmatpush2.bf16.msra.mxu0 0
  %1031 = vmatprep.subr.bf16.mxu0 0
  %1032 = vmatpush2.bf16.msra.mxu0 0
  %1033 = vmatprep.subr.bf16.mxu0 0
  %1034 = vmatpush2.bf16.msra.mxu0 0
  %1035 = vmatprep.subr.bf16.mxu0 0
  %1036 = vmatpush2.bf16.msra.mxu0 0
  %1037 = vmatprep.mubr.bf16.mxu0 0
  %1038 = vmatmul.mubr.bf16.gmra.mxu0 %v1003
  %v1039 = vpop.f32.mrf.mxu0
  %v1040 = vadd.f32 0.0, %v1039
  %v1041 = vpop.f32.mrf.mxu0
  %v1042 = vpop.f32.mrf.mxu0
  %v1043 = vpop.f32.mrf.mxu0
  %1044 = vdwg.mxu0
  %1046 = vrot.lane.b32.xlu0 %v997, 32
  %v1047 = vpop.permute.xlu0 %1046
  %v1049 = vsel %vm250, %v1047, 0
  %1051 = vmatprep.subr.bf16.mxu0 0
  %1052 = vmatpush1.bf16.msra.mxu0 0
  %1053 = vmatprep.subr.bf16.mxu0 0
  %1054 = vmatpush1.bf16.msra.mxu0 0
  %1055 = vmatprep.subr.bf16.mxu0 0
  %1056 = vmatpush1.bf16.msra.mxu0 0
  %1057 = vmatprep.subr.bf16.mxu0 0
  %1058 = vmatpush1.bf16.msra.mxu0 0
  %1059 = vmatprep.subr.bf16.mxu0 0
  %1060 = vmatpush1.bf16.msra.mxu0 0
  %1061 = vmatprep.subr.bf16.mxu0 0
  %1062 = vmatpush1.bf16.msra.mxu0 0
  %1063 = vmatprep.subr.bf16.mxu0 0
  %1064 = vmatpush1.bf16.msra.mxu0 %v498
  %1065 = vmatprep.subr.bf16.mxu0 0
  %1066 = vmatpush1.bf16.msra.mxu0 %v497
  %1067 = vmatprep.subr.bf16.mxu0 0
  %1068 = vmatpush2.bf16.msra.mxu0 0
  %1069 = vmatprep.subr.bf16.mxu0 0
  %1070 = vmatpush2.bf16.msra.mxu0 0
  %1071 = vmatprep.subr.bf16.mxu0 0
  %1072 = vmatpush2.bf16.msra.mxu0 0
  %1073 = vmatprep.subr.bf16.mxu0 0
  %1074 = vmatpush2.bf16.msra.mxu0 0
  %1075 = vmatprep.subr.bf16.mxu0 0
  %1076 = vmatpush2.bf16.msra.mxu0 0
  %1077 = vmatprep.subr.bf16.mxu0 0
  %1078 = vmatpush2.bf16.msra.mxu0 0
  %1079 = vmatprep.subr.bf16.mxu0 0
  %1080 = vmatpush2.bf16.msra.mxu0 0
  %1081 = vmatprep.subr.bf16.mxu0 0
  %1082 = vmatpush2.bf16.msra.mxu0 0
  %1083 = vmatprep.mubr.bf16.mxu0 0
  %1084 = vmatmul.mubr.bf16.gmra.mxu0 %v1049
  %v1085 = vpop.f32.mrf.mxu0
  %v1086 = vadd.f32 %v1040, %v1085
  %v1087 = vpop.f32.mrf.mxu0
  %v1088 = vpop.f32.mrf.mxu0
  %v1089 = vpop.f32.mrf.mxu0
  %1090 = vdwg.mxu0
  %v1091 = vsub.f32 0.0, %v1086
  %v1092 = vmul.f32 %v1091, 1.442695
  %v1093 = vpow.pop %v1092
  %v1094 = vadd.f32 %v1093, 1.0
  %v1095 = vrcp.pop %v1094
  %v1096 = vtanh.pop %v1086
  %v1097 = vmul.f32 %v1095, %v926
  %1099 = vrot.lane.b32.xlu0 %v1096, 64
  %v1100 = vpop.permute.xlu0 %1099
  %v1102 = vmul.f32 %v1095, %v1100
  %1104 = vrot.lane.b32.xlu0 %v1102, 32
  %v1105 = vpop.permute.xlu0 %1104
  %v1107 = vadd.f32 %v1097, %v1105
  %v1108 = vtanh.pop %v1107
  %1110 = vrot.lane.b32.xlu0 %v1108, 64
  %v1111 = vpop.permute.xlu0 %1110
  %v1113 = vmul.f32 %v1095, %v1111
  %v1114 = vadd.f32 %v933, %v1113
  %1115 = vmatprep.subr.bf16.mxu0 0
  %1116 = vmatpush1.bf16.msra.mxu0 0
  %1117 = vmatprep.subr.bf16.mxu0 0
  %1118 = vmatpush1.bf16.msra.mxu0 0
  %1119 = vmatprep.subr.bf16.mxu0 0
  %1120 = vmatpush1.bf16.msra.mxu0 0
  %1121 = vmatprep.subr.bf16.mxu0 0
  %1122 = vmatpush1.bf16.msra.mxu0 0
  %1123 = vmatprep.subr.bf16.mxu0 0
  %1124 = vmatpush1.bf16.msra.mxu0 0
  %1125 = vmatprep.subr.bf16.mxu0 0
  %1126 = vmatpush1.bf16.msra.mxu0 0
  %1127 = vmatprep.subr.bf16.mxu0 0
  %1128 = vmatpush1.bf16.msra.mxu0 %v356
  %1129 = vmatprep.subr.bf16.mxu0 0
  %1130 = vmatpush1.bf16.msra.mxu0 %v355
  %1131 = vmatprep.subr.bf16.mxu0 0
  %1132 = vmatpush2.bf16.msra.mxu0 0
  %1133 = vmatprep.subr.bf16.mxu0 0
  %1134 = vmatpush2.bf16.msra.mxu0 0
  %1135 = vmatprep.subr.bf16.mxu0 0
  %1136 = vmatpush2.bf16.msra.mxu0 0
  %1137 = vmatprep.subr.bf16.mxu0 0
  %1138 = vmatpush2.bf16.msra.mxu0 0
  %1139 = vmatprep.subr.bf16.mxu0 0
  %1140 = vmatpush2.bf16.msra.mxu0 0
  %1141 = vmatprep.subr.bf16.mxu0 0
  %1142 = vmatpush2.bf16.msra.mxu0 0
  %1143 = vmatprep.subr.bf16.mxu0 0
  %1144 = vmatpush2.bf16.msra.mxu0 0
  %1145 = vmatprep.subr.bf16.mxu0 0
  %1146 = vmatpush2.bf16.msra.mxu0 0
  %1147 = vmatprep.mubr.bf16.mxu0 0
  %1148 = vmatmul.mubr.bf16.gmra.mxu0 %v1049
  %v1149 = vpop.f32.mrf.mxu0
  %v1150 = vadd.f32 %v314, %v1149
  %v1151 = vpop.f32.mrf.mxu0
  %v1152 = vpop.f32.mrf.mxu0
  %v1153 = vpop.f32.mrf.mxu0
  %1154 = vdwg.mxu0
  %v1155 = vsub.f32 0.0, %v1150
  %v1156 = vmul.f32 %v1155, 1.442695
  %v1157 = vpow.pop %v1156
  %v1158 = vadd.f32 %v1157, 1.0
  %v1159 = vrcp.pop %v1158
  %v1160 = vtanh.pop %v1150
  %v1161 = vmul.f32 %v1159, %v990
  %1163 = vrot.lane.b32.xlu0 %v1160, 64
  %v1164 = vpop.permute.xlu0 %1163
  %v1166 = vmul.f32 %v1159, %v1164
  %1168 = vrot.lane.b32.xlu0 %v1166, 32
  %v1169 = vpop.permute.xlu0 %1168
  %v1171 = vadd.f32 %v1161, %v1169
  %v1172 = vtanh.pop %v1171
  %1174 = vrot.lane.b32.xlu0 %v1172, 64
  %v1175 = vpop.permute.xlu0 %1174
  %v1177 = vmul.f32 %v1159, %v1175
  %v1178 = vpack.c.bf16 %v1177, %v1177
  %v1179 = vpack.c.bf16 %v1113, %v1113
  %1181 = vrot.lane.b32.xlu0 %v1179, 32
  %v1182 = vpop.permute.xlu0 %1181
  %v1184 = vsel %vm250, %v1182, 0
  %1186 = vmatprep.subr.bf16.mxu0 0
  %1187 = vmatpush1.bf16.msra.mxu0 0
  %1188 = vmatprep.subr.bf16.mxu0 0
  %1189 = vmatpush1.bf16.msra.mxu0 0
  %1190 = vmatprep.subr.bf16.mxu0 0
  %1191 = vmatpush1.bf16.msra.mxu0 0
  %1192 = vmatprep.subr.bf16.mxu0 0
  %1193 = vmatpush1.bf16.msra.mxu0 0
  %1194 = vmatprep.subr.bf16.mxu0 0
  %1195 = vmatpush1.bf16.msra.mxu0 0
  %1196 = vmatprep.subr.bf16.mxu0 0
  %1197 = vmatpush1.bf16.msra.mxu0 0
  %1198 = vmatprep.subr.bf16.mxu0 0
  %1199 = vmatpush1.bf16.msra.mxu0 %v440
  %1200 = vmatprep.subr.bf16.mxu0 0
  %1201 = vmatpush1.bf16.msra.mxu0 %v439
  %1202 = vmatprep.subr.bf16.mxu0 0
  %1203 = vmatpush2.bf16.msra.mxu0 0
  %1204 = vmatprep.subr.bf16.mxu0 0
  %1205 = vmatpush2.bf16.msra.mxu0 0
  %1206 = vmatprep.subr.bf16.mxu0 0
  %1207 = vmatpush2.bf16.msra.mxu0 0
  %1208 = vmatprep.subr.bf16.mxu0 0
  %1209 = vmatpush2.bf16.msra.mxu0 0
  %1210 = vmatprep.subr.bf16.mxu0 0
  %1211 = vmatpush2.bf16.msra.mxu0 0
  %1212 = vmatprep.subr.bf16.mxu0 0
  %1213 = vmatpush2.bf16.msra.mxu0 0
  %1214 = vmatprep.subr.bf16.mxu0 0
  %1215 = vmatpush2.bf16.msra.mxu0 0
  %1216 = vmatprep.subr.bf16.mxu0 0
  %1217 = vmatpush2.bf16.msra.mxu0 0
  %1218 = vmatprep.mubr.bf16.mxu0 0
  %1219 = vmatmul.mubr.bf16.gmra.mxu0 %v1184
  %v1220 = vpop.f32.mrf.mxu0
  %v1221 = vadd.f32 0.0, %v1220
  %v1222 = vpop.f32.mrf.mxu0
  %v1223 = vpop.f32.mrf.mxu0
  %v1224 = vpop.f32.mrf.mxu0
  %1225 = vdwg.mxu0
  %1227 = vrot.lane.b32.xlu0 %v1178, 32
  %v1228 = vpop.permute.xlu0 %1227
  %v1230 = vsel %vm250, %v1228, 0
  %1232 = vmatprep.subr.bf16.mxu0 0
  %1233 = vmatpush1.bf16.msra.mxu0 0
  %1234 = vmatprep.subr.bf16.mxu0 0
  %1235 = vmatpush1.bf16.msra.mxu0 0
  %1236 = vmatprep.subr.bf16.mxu0 0
  %1237 = vmatpush1.bf16.msra.mxu0 0
  %1238 = vmatprep.subr.bf16.mxu0 0
  %1239 = vmatpush1.bf16.msra.mxu0 0
  %1240 = vmatprep.subr.bf16.mxu0 0
  %1241 = vmatpush1.bf16.msra.mxu0 0
  %1242 = vmatprep.subr.bf16.mxu0 0
  %1243 = vmatpush1.bf16.msra.mxu0 0
  %1244 = vmatprep.subr.bf16.mxu0 0
  %1245 = vmatpush1.bf16.msra.mxu0 %v498
  %1246 = vmatprep.subr.bf16.mxu0 0
  %1247 = vmatpush1.bf16.msra.mxu0 %v497
  %1248 = vmatprep.subr.bf16.mxu0 0
  %1249 = vmatpush2.bf16.msra.mxu0 0
  %1250 = vmatprep.subr.bf16.mxu0 0
  %1251 = vmatpush2.bf16.msra.mxu0 0
  %1252 = vmatprep.subr.bf16.mxu0 0
  %1253 = vmatpush2.bf16.msra.mxu0 0
  %1254 = vmatprep.subr.bf16.mxu0 0
  %1255 = vmatpush2.bf16.msra.mxu0 0
  %1256 = vmatprep.subr.bf16.mxu0 0
  %1257 = vmatpush2.bf16.msra.mxu0 0
  %1258 = vmatprep.subr.bf16.mxu0 0
  %1259 = vmatpush2.bf16.msra.mxu0 0
  %1260 = vmatprep.subr.bf16.mxu0 0
  %1261 = vmatpush2.bf16.msra.mxu0 0
  %1262 = vmatprep.subr.bf16.mxu0 0
  %1263 = vmatpush2.bf16.msra.mxu0 0
  %1264 = vmatprep.mubr.bf16.mxu0 0
  %1265 = vmatmul.mubr.bf16.gmra.mxu0 %v1230
  %v1266 = vpop.f32.mrf.mxu0
  %v1267 = vadd.f32 %v1221, %v1266
  %v1268 = vpop.f32.mrf.mxu0
  %v1269 = vpop.f32.mrf.mxu0
  %v1270 = vpop.f32.mrf.mxu0
  %1271 = vdwg.mxu0
  %v1272 = vsub.f32 0.0, %v1267
  %v1273 = vmul.f32 %v1272, 1.442695
  %v1274 = vpow.pop %v1273
  %v1275 = vadd.f32 %v1274, 1.0
  %v1276 = vrcp.pop %v1275
  %v1277 = vtanh.pop %v1267
  %v1278 = vmul.f32 %v1276, %v1107
  %1280 = vrot.lane.b32.xlu0 %v1277, 64
  %v1281 = vpop.permute.xlu0 %1280
  %v1283 = vmul.f32 %v1276, %v1281
  %1285 = vrot.lane.b32.xlu0 %v1283, 32
  %v1286 = vpop.permute.xlu0 %1285
  %v1288 = vadd.f32 %v1278, %v1286
  %v1289 = vtanh.pop %v1288
  %1291 = vrot.lane.b32.xlu0 %v1289, 64
  %v1292 = vpop.permute.xlu0 %1291
  %v1294 = vmul.f32 %v1276, %v1292
  %v1295 = vadd.f32 %v1114, %v1294
  %1296 = vmatprep.subr.bf16.mxu0 0
  %1297 = vmatpush1.bf16.msra.mxu0 0
  %1298 = vmatprep.subr.bf16.mxu0 0
  %1299 = vmatpush1.bf16.msra.mxu0 0
  %1300 = vmatprep.subr.bf16.mxu0 0
  %1301 = vmatpush1.bf16.msra.mxu0 0
  %1302 = vmatprep.subr.bf16.mxu0 0
  %1303 = vmatpush1.bf16.msra.mxu0 0
  %1304 = vmatprep.subr.bf16.mxu0 0
  %1305 = vmatpush1.bf16.msra.mxu0 0
  %1306 = vmatprep.subr.bf16.mxu0 0
  %1307 = vmatpush1.bf16.msra.mxu0 0
  %1308 = vmatprep.subr.bf16.mxu0 0
  %1309 = vmatpush1.bf16.msra.mxu0 %v356
  %1310 = vmatprep.subr.bf16.mxu0 0
  %1311 = vmatpush1.bf16.msra.mxu0 %v355
  %1312 = vmatprep.subr.bf16.mxu0 0
  %1313 = vmatpush2.bf16.msra.mxu0 0
  %1314 = vmatprep.subr.bf16.mxu0 0
  %1315 = vmatpush2.bf16.msra.mxu0 0
  %1316 = vmatprep.subr.bf16.mxu0 0
  %1317 = vmatpush2.bf16.msra.mxu0 0
  %1318 = vmatprep.subr.bf16.mxu0 0
  %1319 = vmatpush2.bf16.msra.mxu0 0
  %1320 = vmatprep.subr.bf16.mxu0 0
  %1321 = vmatpush2.bf16.msra.mxu0 0
  %1322 = vmatprep.subr.bf16.mxu0 0
  %1323 = vmatpush2.bf16.msra.mxu0 0
  %1324 = vmatprep.subr.bf16.mxu0 0
  %1325 = vmatpush2.bf16.msra.mxu0 0
  %1326 = vmatprep.subr.bf16.mxu0 0
  %1327 = vmatpush2.bf16.msra.mxu0 0
  %1328 = vmatprep.mubr.bf16.mxu0 0
  %1329 = vmatmul.mubr.bf16.gmra.mxu0 %v1230
  %v1330 = vpop.f32.mrf.mxu0
  %v1331 = vadd.f32 %v317, %v1330
  %v1332 = vpop.f32.mrf.mxu0
  %v1333 = vpop.f32.mrf.mxu0
  %v1334 = vpop.f32.mrf.mxu0
  %1335 = vdwg.mxu0
  %v1336 = vsub.f32 0.0, %v1331
  %v1337 = vmul.f32 %v1336, 1.442695
  %v1338 = vpow.pop %v1337
  %v1339 = vadd.f32 %v1338, 1.0
  %v1340 = vrcp.pop %v1339
  %v1341 = vtanh.pop %v1331
  %v1342 = vmul.f32 %v1340, %v1171
  %1344 = vrot.lane.b32.xlu0 %v1341, 64
  %v1345 = vpop.permute.xlu0 %1344
  %v1347 = vmul.f32 %v1340, %v1345
  %1349 = vrot.lane.b32.xlu0 %v1347, 32
  %v1350 = vpop.permute.xlu0 %1349
  %v1352 = vadd.f32 %v1342, %v1350
  %v1353 = vtanh.pop %v1352
  %1355 = vrot.lane.b32.xlu0 %v1353, 64
  %v1356 = vpop.permute.xlu0 %1355
  %v1358 = vmul.f32 %v1340, %v1356
  %v1359 = vpack.c.bf16 %v1358, %v1358
  %v1360 = vpack.c.bf16 %v1294, %v1294
  %1362 = vrot.lane.b32.xlu0 %v1360, 32
  %v1363 = vpop.permute.xlu0 %1362
  %v1365 = vsel %vm250, %v1363, 0
  %1367 = vmatprep.subr.bf16.mxu0 0
  %1368 = vmatpush1.bf16.msra.mxu0 0
  %1369 = vmatprep.subr.bf16.mxu0 0
  %1370 = vmatpush1.bf16.msra.mxu0 0
  %1371 = vmatprep.subr.bf16.mxu0 0
  %1372 = vmatpush1.bf16.msra.mxu0 0
  %1373 = vmatprep.subr.bf16.mxu0 0
  %1374 = vmatpush1.bf16.msra.mxu0 0
  %1375 = vmatprep.subr.bf16.mxu0 0
  %1376 = vmatpush1.bf16.msra.mxu0 0
  %1377 = vmatprep.subr.bf16.mxu0 0
  %1378 = vmatpush1.bf16.msra.mxu0 0
  %1379 = vmatprep.subr.bf16.mxu0 0
  %1380 = vmatpush1.bf16.msra.mxu0 %v440
  %1381 = vmatprep.subr.bf16.mxu0 0
  %1382 = vmatpush1.bf16.msra.mxu0 %v439
  %1383 = vmatprep.subr.bf16.mxu0 0
  %1384 = vmatpush2.bf16.msra.mxu0 0
  %1385 = vmatprep.subr.bf16.mxu0 0
  %1386 = vmatpush2.bf16.msra.mxu0 0
  %1387 = vmatprep.subr.bf16.mxu0 0
  %1388 = vmatpush2.bf16.msra.mxu0 0
  %1389 = vmatprep.subr.bf16.mxu0 0
  %1390 = vmatpush2.bf16.msra.mxu0 0
  %1391 = vmatprep.subr.bf16.mxu0 0
  %1392 = vmatpush2.bf16.msra.mxu0 0
  %1393 = vmatprep.subr.bf16.mxu0 0
  %1394 = vmatpush2.bf16.msra.mxu0 0
  %1395 = vmatprep.subr.bf16.mxu0 0
  %1396 = vmatpush2.bf16.msra.mxu0 0
  %1397 = vmatprep.subr.bf16.mxu0 0
  %1398 = vmatpush2.bf16.msra.mxu0 0
  %1399 = vmatprep.mubr.bf16.mxu0 0
  %1400 = vmatmul.mubr.bf16.gmra.mxu0 %v1365
  %v1401 = vpop.f32.mrf.mxu0
  %v1402 = vadd.f32 0.0, %v1401
  %v1403 = vpop.f32.mrf.mxu0
  %v1404 = vpop.f32.mrf.mxu0
  %v1405 = vpop.f32.mrf.mxu0
  %1406 = vdwg.mxu0
  %1408 = vrot.lane.b32.xlu0 %v1359, 32
  %v1409 = vpop.permute.xlu0 %1408
  %v1411 = vsel %vm250, %v1409, 0
  %1413 = vmatprep.subr.bf16.mxu0 0
  %1414 = vmatpush1.bf16.msra.mxu0 0
  %1415 = vmatprep.subr.bf16.mxu0 0
  %1416 = vmatpush1.bf16.msra.mxu0 0
  %1417 = vmatprep.subr.bf16.mxu0 0
  %1418 = vmatpush1.bf16.msra.mxu0 0
  %1419 = vmatprep.subr.bf16.mxu0 0
  %1420 = vmatpush1.bf16.msra.mxu0 0
  %1421 = vmatprep.subr.bf16.mxu0 0
  %1422 = vmatpush1.bf16.msra.mxu0 0
  %1423 = vmatprep.subr.bf16.mxu0 0
  %1424 = vmatpush1.bf16.msra.mxu0 0
  %1425 = vmatprep.subr.bf16.mxu0 0
  %1426 = vmatpush1.bf16.msra.mxu0 %v498
  %1427 = vmatprep.subr.bf16.mxu0 0
  %1428 = vmatpush1.bf16.msra.mxu0 %v497
  %1429 = vmatprep.subr.bf16.mxu0 0
  %1430 = vmatpush2.bf16.msra.mxu0 0
  %1431 = vmatprep.subr.bf16.mxu0 0
  %1432 = vmatpush2.bf16.msra.mxu0 0
  %1433 = vmatprep.subr.bf16.mxu0 0
  %1434 = vmatpush2.bf16.msra.mxu0 0
  %1435 = vmatprep.subr.bf16.mxu0 0
  %1436 = vmatpush2.bf16.msra.mxu0 0
  %1437 = vmatprep.subr.bf16.mxu0 0
  %1438 = vmatpush2.bf16.msra.mxu0 0
  %1439 = vmatprep.subr.bf16.mxu0 0
  %1440 = vmatpush2.bf16.msra.mxu0 0
  %1441 = vmatprep.subr.bf16.mxu0 0
  %1442 = vmatpush2.bf16.msra.mxu0 0
  %1443 = vmatprep.subr.bf16.mxu0 0
  %1444 = vmatpush2.bf16.msra.mxu0 0
  %1445 = vmatprep.mubr.bf16.mxu0 0
  %1446 = vmatmul.mubr.bf16.gmra.mxu0 %v1411
  %v1447 = vpop.f32.mrf.mxu0
  %v1448 = vadd.f32 %v1402, %v1447
  %v1449 = vpop.f32.mrf.mxu0
  %v1450 = vpop.f32.mrf.mxu0
  %v1451 = vpop.f32.mrf.mxu0
  %1452 = vdwg.mxu0
  %v1453 = vsub.f32 0.0, %v1448
  %v1454 = vmul.f32 %v1453, 1.442695
  %v1455 = vpow.pop %v1454
  %v1456 = vadd.f32 %v1455, 1.0
  %v1457 = vrcp.pop %v1456
  %v1458 = vtanh.pop %v1448
  %v1459 = vmul.f32 %v1457, %v1288
  %1461 = vrot.lane.b32.xlu0 %v1458, 64
  %v1462 = vpop.permute.xlu0 %1461
  %v1464 = vmul.f32 %v1457, %v1462
  %1466 = vrot.lane.b32.xlu0 %v1464, 32
  %v1467 = vpop.permute.xlu0 %1466
  %v1469 = vadd.f32 %v1459, %v1467
  %v1470 = vtanh.pop %v1469
  %1472 = vrot.lane.b32.xlu0 %v1470, 64
  %v1473 = vpop.permute.xlu0 %1472
  %v1475 = vmul.f32 %v1457, %v1473
  %v1476 = vadd.f32 %v1295, %v1475
  %1477 = vmatprep.subr.bf16.mxu0 0
  %1478 = vmatpush1.bf16.msra.mxu0 0
  %1479 = vmatprep.subr.bf16.mxu0 0
  %1480 = vmatpush1.bf16.msra.mxu0 0
  %1481 = vmatprep.subr.bf16.mxu0 0
  %1482 = vmatpush1.bf16.msra.mxu0 0
  %1483 = vmatprep.subr.bf16.mxu0 0
  %1484 = vmatpush1.bf16.msra.mxu0 0
  %1485 = vmatprep.subr.bf16.mxu0 0
  %1486 = vmatpush1.bf16.msra.mxu0 0
  %1487 = vmatprep.subr.bf16.mxu0 0
  %1488 = vmatpush1.bf16.msra.mxu0 0
  %1489 = vmatprep.subr.bf16.mxu0 0
  %1490 = vmatpush1.bf16.msra.mxu0 %v356
  %1491 = vmatprep.subr.bf16.mxu0 0
  %1492 = vmatpush1.bf16.msra.mxu0 %v355
  %1493 = vmatprep.subr.bf16.mxu0 0
  %1494 = vmatpush2.bf16.msra.mxu0 0
  %1495 = vmatprep.subr.bf16.mxu0 0
  %1496 = vmatpush2.bf16.msra.mxu0 0
  %1497 = vmatprep.subr.bf16.mxu0 0
  %1498 = vmatpush2.bf16.msra.mxu0 0
  %1499 = vmatprep.subr.bf16.mxu0 0
  %1500 = vmatpush2.bf16.msra.mxu0 0
  %1501 = vmatprep.subr.bf16.mxu0 0
  %1502 = vmatpush2.bf16.msra.mxu0 0
  %1503 = vmatprep.subr.bf16.mxu0 0
  %1504 = vmatpush2.bf16.msra.mxu0 0
  %1505 = vmatprep.subr.bf16.mxu0 0
  %1506 = vmatpush2.bf16.msra.mxu0 0
  %1507 = vmatprep.subr.bf16.mxu0 0
  %1508 = vmatpush2.bf16.msra.mxu0 0
  %1509 = vmatprep.mubr.bf16.mxu0 0
  %1510 = vmatmul.mubr.bf16.gmra.mxu0 %v1411
  %v1511 = vpop.f32.mrf.mxu0
  %v1512 = vadd.f32 %v322, %v1511
  %v1513 = vpop.f32.mrf.mxu0
  %v1514 = vpop.f32.mrf.mxu0
  %v1515 = vpop.f32.mrf.mxu0
  %1516 = vdwg.mxu0
  %v1517 = vsub.f32 0.0, %v1512
  %v1518 = vmul.f32 %v1517, 1.442695
  %v1519 = vpow.pop %v1518
  %v1520 = vadd.f32 %v1519, 1.0
  %v1521 = vrcp.pop %v1520
  %v1522 = vtanh.pop %v1512
  %v1523 = vmul.f32 %v1521, %v1352
  %1525 = vrot.lane.b32.xlu0 %v1522, 64
  %v1526 = vpop.permute.xlu0 %1525
  %v1528 = vmul.f32 %v1521, %v1526
  %1530 = vrot.lane.b32.xlu0 %v1528, 32
  %v1531 = vpop.permute.xlu0 %1530
  %v1533 = vadd.f32 %v1523, %v1531
  %v1534 = vtanh.pop %v1533
  %1536 = vrot.lane.b32.xlu0 %v1534, 64
  %v1537 = vpop.permute.xlu0 %1536
  %v1539 = vmul.f32 %v1521, %v1537
  %v1540 = vpack.c.bf16 %v1539, %v1539
  %v1541 = vpack.c.bf16 %v1475, %v1475
  %1543 = vrot.lane.b32.xlu0 %v1541, 32
  %v1544 = vpop.permute.xlu0 %1543
  %v1546 = vsel %vm250, %v1544, 0
  %1548 = vmatprep.subr.bf16.mxu0 0
  %1549 = vmatpush1.bf16.msra.mxu0 0
  %1550 = vmatprep.subr.bf16.mxu0 0
  %1551 = vmatpush1.bf16.msra.mxu0 0
  %1552 = vmatprep.subr.bf16.mxu0 0
  %1553 = vmatpush1.bf16.msra.mxu0 0
  %1554 = vmatprep.subr.bf16.mxu0 0
  %1555 = vmatpush1.bf16.msra.mxu0 0
  %1556 = vmatprep.subr.bf16.mxu0 0
  %1557 = vmatpush1.bf16.msra.mxu0 0
  %1558 = vmatprep.subr.bf16.mxu0 0
  %1559 = vmatpush1.bf16.msra.mxu0 0
  %1560 = vmatprep.subr.bf16.mxu0 0
  %1561 = vmatpush1.bf16.msra.mxu0 %v440
  %1562 = vmatprep.subr.bf16.mxu0 0
  %1563 = vmatpush1.bf16.msra.mxu0 %v439
  %1564 = vmatprep.subr.bf16.mxu0 0
  %1565 = vmatpush2.bf16.msra.mxu0 0
  %1566 = vmatprep.subr.bf16.mxu0 0
  %1567 = vmatpush2.bf16.msra.mxu0 0
  %1568 = vmatprep.subr.bf16.mxu0 0
  %1569 = vmatpush2.bf16.msra.mxu0 0
  %1570 = vmatprep.subr.bf16.mxu0 0
  %1571 = vmatpush2.bf16.msra.mxu0 0
  %1572 = vmatprep.subr.bf16.mxu0 0
  %1573 = vmatpush2.bf16.msra.mxu0 0
  %1574 = vmatprep.subr.bf16.mxu0 0
  %1575 = vmatpush2.bf16.msra.mxu0 0
  %1576 = vmatprep.subr.bf16.mxu0 0
  %1577 = vmatpush2.bf16.msra.mxu0 0
  %1578 = vmatprep.subr.bf16.mxu0 0
  %1579 = vmatpush2.bf16.msra.mxu0 0
  %1580 = vmatprep.mubr.bf16.mxu0 0
  %1581 = vmatmul.mubr.bf16.gmra.mxu0 %v1546
  %v1582 = vpop.f32.mrf.mxu0
  %v1583 = vadd.f32 0.0, %v1582
  %v1584 = vpop.f32.mrf.mxu0
  %v1585 = vpop.f32.mrf.mxu0
  %v1586 = vpop.f32.mrf.mxu0
  %1587 = vdwg.mxu0
  %1589 = vrot.lane.b32.xlu0 %v1540, 32
  %v1590 = vpop.permute.xlu0 %1589
  %v1592 = vsel %vm250, %v1590, 0
  %1594 = vmatprep.subr.bf16.mxu0 0
  %1595 = vmatpush1.bf16.msra.mxu0 0
  %1596 = vmatprep.subr.bf16.mxu0 0
  %1597 = vmatpush1.bf16.msra.mxu0 0
  %1598 = vmatprep.subr.bf16.mxu0 0
  %1599 = vmatpush1.bf16.msra.mxu0 0
  %1600 = vmatprep.subr.bf16.mxu0 0
  %1601 = vmatpush1.bf16.msra.mxu0 0
  %1602 = vmatprep.subr.bf16.mxu0 0
  %1603 = vmatpush1.bf16.msra.mxu0 0
  %1604 = vmatprep.subr.bf16.mxu0 0
  %1605 = vmatpush1.bf16.msra.mxu0 0
  %1606 = vmatprep.subr.bf16.mxu0 0
  %1607 = vmatpush1.bf16.msra.mxu0 %v498
  %1608 = vmatprep.subr.bf16.mxu0 0
  %1609 = vmatpush1.bf16.msra.mxu0 %v497
  %1610 = vmatprep.subr.bf16.mxu0 0
  %1611 = vmatpush2.bf16.msra.mxu0 0
  %1612 = vmatprep.subr.bf16.mxu0 0
  %1613 = vmatpush2.bf16.msra.mxu0 0
  %1614 = vmatprep.subr.bf16.mxu0 0
  %1615 = vmatpush2.bf16.msra.mxu0 0
  %1616 = vmatprep.subr.bf16.mxu0 0
  %1617 = vmatpush2.bf16.msra.mxu0 0
  %1618 = vmatprep.subr.bf16.mxu0 0
  %1619 = vmatpush2.bf16.msra.mxu0 0
  %1620 = vmatprep.subr.bf16.mxu0 0
  %1621 = vmatpush2.bf16.msra.mxu0 0
  %1622 = vmatprep.subr.bf16.mxu0 0
  %1623 = vmatpush2.bf16.msra.mxu0 0
  %1624 = vmatprep.subr.bf16.mxu0 0
  %1625 = vmatpush2.bf16.msra.mxu0 0
  %1626 = vmatprep.mubr.bf16.mxu0 0
  %1627 = vmatmul.mubr.bf16.gmra.mxu0 %v1592
  %v1628 = vpop.f32.mrf.mxu0
  %v1629 = vadd.f32 %v1583, %v1628
  %v1630 = vpop.f32.mrf.mxu0
  %v1631 = vpop.f32.mrf.mxu0
  %v1632 = vpop.f32.mrf.mxu0
  %1633 = vdwg.mxu0
  %v1634 = vsub.f32 0.0, %v1629
  %v1635 = vmul.f32 %v1634, 1.442695
  %v1636 = vpow.pop %v1635
  %v1637 = vadd.f32 %v1636, 1.0
  %v1638 = vrcp.pop %v1637
  %v1639 = vtanh.pop %v1629
  %v1640 = vmul.f32 %v1638, %v1469
  %1642 = vrot.lane.b32.xlu0 %v1639, 64
  %v1643 = vpop.permute.xlu0 %1642
  %v1645 = vmul.f32 %v1638, %v1643
  %1647 = vrot.lane.b32.xlu0 %v1645, 32
  %v1648 = vpop.permute.xlu0 %1647
  %v1650 = vadd.f32 %v1640, %v1648
  %v1651 = vtanh.pop %v1650
  %1653 = vrot.lane.b32.xlu0 %v1651, 64
  %v1654 = vpop.permute.xlu0 %1653
  %v1656 = vmul.f32 %v1638, %v1654
  %v1657 = vadd.f32 %v1476, %v1656
  %1658 = vmatprep.subr.bf16.mxu0 0
  %1659 = vmatpush1.bf16.msra.mxu0 0
  %1660 = vmatprep.subr.bf16.mxu0 0
  %1661 = vmatpush1.bf16.msra.mxu0 0
  %1662 = vmatprep.subr.bf16.mxu0 0
  %1663 = vmatpush1.bf16.msra.mxu0 0
  %1664 = vmatprep.subr.bf16.mxu0 0
  %1665 = vmatpush1.bf16.msra.mxu0 0
  %1666 = vmatprep.subr.bf16.mxu0 0
  %1667 = vmatpush1.bf16.msra.mxu0 0
  %1668 = vmatprep.subr.bf16.mxu0 0
  %1669 = vmatpush1.bf16.msra.mxu0 0
  %1670 = vmatprep.subr.bf16.mxu0 0
  %1671 = vmatpush1.bf16.msra.mxu0 %v356
  %1672 = vmatprep.subr.bf16.mxu0 0
  %1673 = vmatpush1.bf16.msra.mxu0 %v355
  %1674 = vmatprep.subr.bf16.mxu0 0
  %1675 = vmatpush2.bf16.msra.mxu0 0
  %1676 = vmatprep.subr.bf16.mxu0 0
  %1677 = vmatpush2.bf16.msra.mxu0 0
  %1678 = vmatprep.subr.bf16.mxu0 0
  %1679 = vmatpush2.bf16.msra.mxu0 0
  %1680 = vmatprep.subr.bf16.mxu0 0
  %1681 = vmatpush2.bf16.msra.mxu0 0
  %1682 = vmatprep.subr.bf16.mxu0 0
  %1683 = vmatpush2.bf16.msra.mxu0 0
  %1684 = vmatprep.subr.bf16.mxu0 0
  %1685 = vmatpush2.bf16.msra.mxu0 0
  %1686 = vmatprep.subr.bf16.mxu0 0
  %1687 = vmatpush2.bf16.msra.mxu0 0
  %1688 = vmatprep.subr.bf16.mxu0 0
  %1689 = vmatpush2.bf16.msra.mxu0 0
  %1690 = vmatprep.mubr.bf16.mxu0 0
  %1691 = vmatmul.mubr.bf16.gmra.mxu0 %v1592
  %v1692 = vpop.f32.mrf.mxu0
  %v1693 = vadd.f32 %v325, %v1692
  %v1694 = vpop.f32.mrf.mxu0
  %v1695 = vpop.f32.mrf.mxu0
  %v1696 = vpop.f32.mrf.mxu0
  %1697 = vdwg.mxu0
  %v1698 = vsub.f32 0.0, %v1693
  %v1699 = vmul.f32 %v1698, 1.442695
  %v1700 = vpow.pop %v1699
  %v1701 = vadd.f32 %v1700, 1.0
  %v1702 = vrcp.pop %v1701
  %v1703 = vtanh.pop %v1693
  %v1704 = vmul.f32 %v1702, %v1533
  %1706 = vrot.lane.b32.xlu0 %v1703, 64
  %v1707 = vpop.permute.xlu0 %1706
  %v1709 = vmul.f32 %v1702, %v1707
  %1711 = vrot.lane.b32.xlu0 %v1709, 32
  %v1712 = vpop.permute.xlu0 %1711
  %v1714 = vadd.f32 %v1704, %v1712
  %v1715 = vtanh.pop %v1714
  %1717 = vrot.lane.b32.xlu0 %v1715, 64
  %v1718 = vpop.permute.xlu0 %1717
  %v1720 = vmul.f32 %v1702, %v1718
  %v1721 = vpack.c.bf16 %v1720, %v1720
  %v1722 = vpack.c.bf16 %v1656, %v1656
  %1724 = vrot.lane.b32.xlu0 %v1722, 32
  %v1725 = vpop.permute.xlu0 %1724
  %v1727 = vsel %vm250, %v1725, 0
  %1729 = vmatprep.subr.bf16.mxu0 0
  %1730 = vmatpush1.bf16.msra.mxu0 0
  %1731 = vmatprep.subr.bf16.mxu0 0
  %1732 = vmatpush1.bf16.msra.mxu0 0
  %1733 = vmatprep.subr.bf16.mxu0 0
  %1734 = vmatpush1.bf16.msra.mxu0 0
  %1735 = vmatprep.subr.bf16.mxu0 0
  %1736 = vmatpush1.bf16.msra.mxu0 0
  %1737 = vmatprep.subr.bf16.mxu0 0
  %1738 = vmatpush1.bf16.msra.mxu0 0
  %1739 = vmatprep.subr.bf16.mxu0 0
  %1740 = vmatpush1.bf16.msra.mxu0 0
  %1741 = vmatprep.subr.bf16.mxu0 0
  %1742 = vmatpush1.bf16.msra.mxu0 %v440
  %1743 = vmatprep.subr.bf16.mxu0 0
  %1744 = vmatpush1.bf16.msra.mxu0 %v439
  %1745 = vmatprep.subr.bf16.mxu0 0
  %1746 = vmatpush2.bf16.msra.mxu0 0
  %1747 = vmatprep.subr.bf16.mxu0 0
  %1748 = vmatpush2.bf16.msra.mxu0 0
  %1749 = vmatprep.subr.bf16.mxu0 0
  %1750 = vmatpush2.bf16.msra.mxu0 0
  %1751 = vmatprep.subr.bf16.mxu0 0
  %1752 = vmatpush2.bf16.msra.mxu0 0
  %1753 = vmatprep.subr.bf16.mxu0 0
  %1754 = vmatpush2.bf16.msra.mxu0 0
  %1755 = vmatprep.subr.bf16.mxu0 0
  %1756 = vmatpush2.bf16.msra.mxu0 0
  %1757 = vmatprep.subr.bf16.mxu0 0
  %1758 = vmatpush2.bf16.msra.mxu0 0
  %1759 = vmatprep.subr.bf16.mxu0 0
  %1760 = vmatpush2.bf16.msra.mxu0 0
  %1761 = vmatprep.mubr.bf16.mxu0 0
  %1762 = vmatmul.mubr.bf16.gmra.mxu0 %v1727
  %v1763 = vpop.f32.mrf.mxu0
  %v1764 = vadd.f32 0.0, %v1763
  %v1765 = vpop.f32.mrf.mxu0
  %v1766 = vpop.f32.mrf.mxu0
  %v1767 = vpop.f32.mrf.mxu0
  %1768 = vdwg.mxu0
  %1770 = vrot.lane.b32.xlu0 %v1721, 32
  %v1771 = vpop.permute.xlu0 %1770
  %v1773 = vsel %vm250, %v1771, 0
  %1775 = vmatprep.subr.bf16.mxu0 0
  %1776 = vmatpush1.bf16.msra.mxu0 0
  %1777 = vmatprep.subr.bf16.mxu0 0
  %1778 = vmatpush1.bf16.msra.mxu0 0
  %1779 = vmatprep.subr.bf16.mxu0 0
  %1780 = vmatpush1.bf16.msra.mxu0 0
  %1781 = vmatprep.subr.bf16.mxu0 0
  %1782 = vmatpush1.bf16.msra.mxu0 0
  %1783 = vmatprep.subr.bf16.mxu0 0
  %1784 = vmatpush1.bf16.msra.mxu0 0
  %1785 = vmatprep.subr.bf16.mxu0 0
  %1786 = vmatpush1.bf16.msra.mxu0 0
  %1787 = vmatprep.subr.bf16.mxu0 0
  %1788 = vmatpush1.bf16.msra.mxu0 %v498
  %1789 = vmatprep.subr.bf16.mxu0 0
  %1790 = vmatpush1.bf16.msra.mxu0 %v497
  %1791 = vmatprep.subr.bf16.mxu0 0
  %1792 = vmatpush2.bf16.msra.mxu0 0
  %1793 = vmatprep.subr.bf16.mxu0 0
  %1794 = vmatpush2.bf16.msra.mxu0 0
  %1795 = vmatprep.subr.bf16.mxu0 0
  %1796 = vmatpush2.bf16.msra.mxu0 0
  %1797 = vmatprep.subr.bf16.mxu0 0
  %1798 = vmatpush2.bf16.msra.mxu0 0
  %1799 = vmatprep.subr.bf16.mxu0 0
  %1800 = vmatpush2.bf16.msra.mxu0 0
  %1801 = vmatprep.subr.bf16.mxu0 0
  %1802 = vmatpush2.bf16.msra.mxu0 0
  %1803 = vmatprep.subr.bf16.mxu0 0
  %1804 = vmatpush2.bf16.msra.mxu0 0
  %1805 = vmatprep.subr.bf16.mxu0 0
  %1806 = vmatpush2.bf16.msra.mxu0 0
  %1807 = vmatprep.mubr.bf16.mxu0 0
  %1808 = vmatmul.mubr.bf16.gmra.mxu0 %v1773
  %v1809 = vpop.f32.mrf.mxu0
  %v1810 = vadd.f32 %v1764, %v1809
  %v1811 = vpop.f32.mrf.mxu0
  %v1812 = vpop.f32.mrf.mxu0
  %v1813 = vpop.f32.mrf.mxu0
  %1814 = vdwg.mxu0
  %v1815 = vsub.f32 0.0, %v1810
  %v1816 = vmul.f32 %v1815, 1.442695
  %v1817 = vpow.pop %v1816
  %v1818 = vadd.f32 %v1817, 1.0
  %v1819 = vrcp.pop %v1818
  %v1820 = vtanh.pop %v1810
  %v1821 = vmul.f32 %v1819, %v1650
  %1823 = vrot.lane.b32.xlu0 %v1820, 64
  %v1824 = vpop.permute.xlu0 %1823
  %v1826 = vmul.f32 %v1819, %v1824
  %1828 = vrot.lane.b32.xlu0 %v1826, 32
  %v1829 = vpop.permute.xlu0 %1828
  %v1831 = vadd.f32 %v1821, %v1829
  %v1832 = vtanh.pop %v1831
  %1834 = vrot.lane.b32.xlu0 %v1832, 64
  %v1835 = vpop.permute.xlu0 %1834
  %v1837 = vmul.f32 %v1819, %v1835
  %v1838 = vadd.f32 %v1657, %v1837
  %v1839 = vmul.f32 %v1838, 0.125
  %v1840 = vld [vmem:[%s8] sm:$0xff]
  %v1841 = vld [vmem:[%s8 + $0x8] sm:$0xff]
  %v1842 = vld [vmem:[%s8 + $0x10] sm:$0xff]
  %v1843 = vld [vmem:[%s8 + $0x18] sm:$0xff]
  %v1844 = vld [vmem:[%s9] sm:$0x1]
  %v1846 = vlaneseq
  %v1847 = vshrl.u32 %v1846, 7
  %v1848 = vsub.s32 0, %v1847
  %v1849 = vrot.slane %v1844, %v1848
  %1852 = vrot.lane.b32.xlu0 %v1839, 32
  %v1853 = vpop.permute.xlu0 %1852
  %v1854 = vsel %vm250, %v1853, 0
  %1856 = vmatprep.subr.mxu0 0.0
  %1857 = vmatpush1.msra.mxu0 0.0
  %1858 = vmatprep.subr.mxu0 0.0
  %1859 = vmatpush1.msra.mxu0 0.0
  %1860 = vmatprep.subr.mxu0 0.0
  %1861 = vmatpush1.msra.mxu0 0.0
  %1862 = vmatprep.subr.mxu0 0.0
  %1863 = vmatpush1.msra.mxu0 0.0
  %1864 = vmatprep.subr.mxu0 0.0
  %1865 = vmatpush1.msra.mxu0 0.0
  %1866 = vmatprep.subr.mxu0 0.0
  %1867 = vmatpush1.msra.mxu0 0.0
  %1868 = vmatprep.subr.mxu0 0.0
  %1869 = vmatpush1.msra.mxu0 0.0
  %1870 = vmatprep.subr.mxu0 0.0
  %1871 = vmatpush1.msra.mxu0 0.0
  %1872 = vmatprep.subr.mxu0 0.0
  %1873 = vmatpush1.msra.mxu0 0.0
  %1874 = vmatprep.subr.mxu0 0.0
  %1875 = vmatpush1.msra.mxu0 0.0
  %1876 = vmatprep.subr.mxu0 0.0
  %1877 = vmatpush1.msra.mxu0 0.0
  %1878 = vmatprep.subr.mxu0 0.0
  %1879 = vmatpush1.msra.mxu0 0.0
  %1880 = vmatprep.subr.mxu0 0.0
  %1881 = vmatpush1.msra.mxu0 %v1843
  %1882 = vmatprep.subr.mxu0 0.0
  %1883 = vmatpush1.msra.mxu0 %v1842
  %1884 = vmatprep.subr.mxu0 0.0
  %1885 = vmatpush1.msra.mxu0 %v1841
  %1886 = vmatprep.subr.mxu0 0.0
  %1887 = vmatpush1.msra.mxu0 %v1840
  %1888 = vmatprep.subr.mxu0 0.0
  %1889 = vmatpush2.msra.mxu0 0.0
  %1890 = vmatprep.subr.mxu0 0.0
  %1891 = vmatpush2.msra.mxu0 0.0
  %1892 = vmatprep.subr.mxu0 0.0
  %1893 = vmatpush2.msra.mxu0 0.0
  %1894 = vmatprep.subr.mxu0 0.0
  %1895 = vmatpush2.msra.mxu0 0.0
  %1896 = vmatprep.subr.mxu0 0.0
  %1897 = vmatpush2.msra.mxu0 0.0
  %1898 = vmatprep.subr.mxu0 0.0
  %1899 = vmatpush2.msra.mxu0 0.0
  %1900 = vmatprep.subr.mxu0 0.0
  %1901 = vmatpush2.msra.mxu0 0.0
  %1902 = vmatprep.subr.mxu0 0.0
  %1903 = vmatpush2.msra.mxu0 0.0
  %1904 = vmatprep.subr.mxu0 0.0
  %1905 = vmatpush2.msra.mxu0 0.0
  %1906 = vmatprep.subr.mxu0 0.0
  %1907 = vmatpush2.msra.mxu0 0.0
  %1908 = vmatprep.subr.mxu0 0.0
  %1909 = vmatpush2.msra.mxu0 0.0
  %1910 = vmatprep.subr.mxu0 0.0
  %1911 = vmatpush2.msra.mxu0 0.0
  %1912 = vmatprep.subr.mxu0 0.0
  %1913 = vmatpush2.msra.mxu0 0.0
  %1914 = vmatprep.subr.mxu0 0.0
  %1915 = vmatpush2.msra.mxu0 0.0
  %1916 = vmatprep.subr.mxu0 0.0
  %1917 = vmatpush2.msra.mxu0 0.0
  %1918 = vmatprep.subr.mxu0 0.0
  %1919 = vmatpush2.msra.mxu0 0.0
  %1920 = vmatprep.mubr.f32.mxu0 0.0
  %1921 = vmatmul.mubr.f32.gmra.mxu0 %v1854
  %v1922 = vpop.f32.mrf.mxu0
  %v1923 = vadd.f32 %v1849, %v1922
  %v1924 = vpop.f32.mrf.mxu0
  %1925 = vdwg.mxu0
  %vm1926 = vcmask 15360
  %v1927 = vsel %vm1926, %v1923, -inf
  %1928 = vmax.xlane.f32.xlu0 %v1927
  %v1929 = vpop.xlane.xlu0 %1928
  %v1930 = vsub.f32 %v1923, %v1929
  %v1931 = vmul.f32 %v1930, 1.442695
  %v1932 = vpow.pop %v1931
  %v1933 = vsel %vm1926, %v1932, 0.0
  %1934 = vadd.xlane.f32.xlu0 %v1933
  %v1935 = vpop.xlane.xlu0 %1934
  %v1936 = vrcp.pop %v1935
  %v1937 = vmul.f32 %v1932, %v1936
  %1938 = vst.msk [vmem:[%s10] sm:$0xff] %vm1926, %v1937
  %1940 = vrot.lane.b32.xlu0 %v1720, 32
  %v1941 = vpop.permute.xlu0 %1940
  %1943 = vst.msk [vmem:[%s11] sm:$0xff] %vm250, %v1941
  %1945 = vrot.lane.b32.xlu0 %v1714, 96
  %v1946 = vpop.permute.xlu0 %1945
  %1948 = vst.msk [vmem:[%s12] sm:$0xff] %vm250, %v1946
  %1950 = vrot.lane.b32.xlu0 %v1837, 32
  %v1951 = vpop.permute.xlu0 %1950
  %s1953 = scalar_lea.vmem %s11, 8
  %1954 = vst.msk [vmem:[%s1953] sm:$0xff] %vm250, %v1951
  %1956 = vrot.lane.b32.xlu0 %v1831, 96
  %v1957 = vpop.permute.xlu0 %1956
  %s1959 = scalar_lea.vmem %s12, 8
  %1960 = vst.msk [vmem:[%s1959] sm:$0xff] %vm250, %v1957
  // Predicated region
  $region42: #{basic_rnn_forward.1} parent=0 // pred_check
    _
  $region43: #{basic_rnn_forward.1} parent=0 // pred_check_branch
    %1962 = sbr.rel (0) target = $region45
  $region44: #{basic_rnn_forward.1} parent=0 // pred_region
    _
  $region45: #{basic_rnn_forward.1} parent=0 // pred_fallthru
    _
  // Predicated region
  $region46: #{basic_rnn_forward.1} parent=0 // pred_check
    _
  $region47: #{basic_rnn_forward.1} parent=0 // pred_check_branch
    %1964 = sbr.rel (0) target = $region49
  $region48: #{basic_rnn_forward.1} parent=0 // pred_region
    _
  $region49: #{basic_rnn_forward.1} parent=0 // pred_fallthru
    _
  // Predicated region
  $region50: #{basic_rnn_forward.1} parent=0 // pred_check
    _
  $region51: #{basic_rnn_forward.1} parent=0 // pred_check_branch
    %1966 = sbr.rel (0) target = $region53
  $region52: #{basic_rnn_forward.1} parent=0 // pred_region
    _
  $region53: #{basic_rnn_forward.1} parent=0 // pred_fallthru
    _
  // Predicated region
  $region54: #{basic_rnn_forward.1} parent=0 // pred_check
    _
  $region55: #{basic_rnn_forward.1} parent=0 // pred_check_branch
    %1968 = sbr.rel (0) target = $region57
  $region56: #{basic_rnn_forward.1} parent=0 // pred_region
    _
  $region57: #{basic_rnn_forward.1} parent=0 // pred_fallthru
    _
  // Predicated region
  $region58: #{basic_rnn_forward.1} parent=0 // pred_check
    _
  $region59: #{basic_rnn_forward.1} parent=0 // pred_check_branch
    %1970 = sbr.rel (0) target = $region61
  $region60: #{basic_rnn_forward.1} parent=0 // pred_region
    _
  $region61: #{basic_rnn_forward.1} parent=0 // pred_fallthru
    _
  // Predicated region
  $region62: #{basic_rnn_forward.1} parent=0 // pred_check
    _
  $region63: #{basic_rnn_forward.1} parent=0 // pred_check_branch
    %1972 = sbr.rel (0) target = $region65
  $region64: #{basic_rnn_forward.1} parent=0 // pred_region
    _
  $region65: #{basic_rnn_forward.1} parent=0 // pred_fallthru
    _

</llo_original>
